<compile_context>
chip_gen: v7x
topology: tpu7x:2x2x1
jax: 0.10.0
libtpu: 0.0.40
codegen_flags: <defaults>
</compile_context>

<pallas_src>
import functools

import jax
import jax.numpy as jnp
from jax.experimental import pallas as pl
from jax.experimental.pallas import tpu as pltpu


def _mlp_adj_kernel(x_ref, w1_ref, b1_ref, w2_ref, b2_ref, w3_ref, b3_ref,
                    w4_ref, b4_ref, out_ref):
    """One M-tile of points through the whole fused MLP.

    x_ref : (TILE_M, C0)      point features (channels-last)
    wK_ref: (C_{k-1}, C_k)    BN-folded, transposed conv weights
    bK_ref: (1, C_k)          BN-folded biases
    out   : (TILE_M, C4_PAD)  tanh output, padded to 128 lanes
    """
    h = x_ref[...]

    h = jnp.dot(h, w1_ref[...], preferred_element_type=jnp.float32) + b1_ref[...]
    h = jnp.maximum(h, 0.0)

    h = jnp.dot(h, w2_ref[...], preferred_element_type=jnp.float32) + b2_ref[...]
    h = jnp.maximum(h, 0.0)

    h = jnp.dot(h, w3_ref[...], preferred_element_type=jnp.float32) + b3_ref[...]
    h = jnp.maximum(h, 0.0)

    h = jnp.dot(h, w4_ref[...], preferred_element_type=jnp.float32) + b4_ref[...]
    out_ref[...] = jnp.tanh(h)


def _fold_bn(w, b, gamma, beta, mean, var, eps):
    """Fold inference-mode BatchNorm1d into a 1x1 conv (matmul) weight/bias."""
    scale = gamma / jnp.sqrt(var + eps)                 # (C_out,)
    w_eff = w * scale[:, None]                          # (C_out, C_in)
    b_eff = (b - mean) * scale + beta                   # (C_out,)
    return w_eff, b_eff


def mlp_adj_forward(x, params, *, eps=1e-5, tile_m=256):
    """x: (B, C, N) float32.  Returns (B, N, 3) matching mlpAdj.forward."""
    B, C0, N = x.shape
    M = B * N

    # ---- fold BN into the convs, transpose weights to (C_in, C_out) -------
    w1, b1 = _fold_bn(params["w1"], params["b1"], params["g1"], params["be1"],
                      params["m1"], params["v1"], eps)
    w2, b2 = _fold_bn(params["w2"], params["b2"], params["g2"], params["be2"],
                      params["m2"], params["v2"], eps)
    w3, b3 = _fold_bn(params["w3"], params["b3"], params["g3"], params["be3"],
                      params["m3"], params["v3"], eps)
    w4, b4 = params["w4"], params["b4"]                 # no BN on layer 4

    c1 = w1.shape[0]
    c2 = w2.shape[0]
    c3 = w3.shape[0]
    c4 = w4.shape[0]                                    # == 3
    c4p = 128                                           # lane-dense padded out

    w1t = jnp.transpose(w1).astype(jnp.float32)         # (C0, C1)
    w2t = jnp.transpose(w2).astype(jnp.float32)         # (C1, C2)
    w3t = jnp.transpose(w3).astype(jnp.float32)         # (C2, C3)
    w4t_pad = jnp.zeros((c3, c4p), jnp.float32).at[:, :c4].set(
        jnp.transpose(w4).astype(jnp.float32))          # (C3, 128)
    b1r = b1.astype(jnp.float32)[None, :]               # (1, C1)
    b2r = b2.astype(jnp.float32)[None, :]
    b3r = b3.astype(jnp.float32)[None, :]
    b4r_pad = jnp.zeros((1, c4p), jnp.float32).at[0, :c4].set(
        b4.astype(jnp.float32))                         # (1, 128)

    # ---- channels-last flatten + pad M to a tile multiple ------------------
    x_flat = jnp.transpose(x, (0, 2, 1)).reshape(M, C0).astype(jnp.float32)
    tile_m = min(tile_m, max(8, M))
    m_pad = pl.cdiv(M, tile_m) * tile_m
    if m_pad != M:
        x_flat = jnp.pad(x_flat, ((0, m_pad - M), (0, 0)))

    grid = (m_pad // tile_m,)

    flops = 2 * m_pad * (C0 * c1 + c1 * c2 + c2 * c3 + c3 * c4p)
    bytes_accessed = 4 * (m_pad * C0 + m_pad * c4p
                          + C0 * c1 + c1 * c2 + c2 * c3 + c3 * c4p
                          + c1 + c2 + c3 + c4p)
    cost = pl.CostEstimate(flops=flops,
                           transcendentals=m_pad * c4p,
                           bytes_accessed=bytes_accessed)

    out_pad = pl.pallas_call(
        _mlp_adj_kernel,
        out_shape=jax.ShapeDtypeStruct((m_pad, c4p), jnp.float32),
        grid=grid,
        in_specs=[
            pl.BlockSpec((tile_m, C0), lambda i: (i, 0)),   # x tile (pipelined)
            pl.BlockSpec((C0, c1), lambda i: (0, 0)),       # resident weights
            pl.BlockSpec((1, c1), lambda i: (0, 0)),
            pl.BlockSpec((c1, c2), lambda i: (0, 0)),
            pl.BlockSpec((1, c2), lambda i: (0, 0)),
            pl.BlockSpec((c2, c3), lambda i: (0, 0)),
            pl.BlockSpec((1, c3), lambda i: (0, 0)),
            pl.BlockSpec((c3, c4p), lambda i: (0, 0)),
            pl.BlockSpec((1, c4p), lambda i: (0, 0)),
        ],
        out_specs=pl.BlockSpec((tile_m, c4p), lambda i: (i, 0)),
        compiler_params=pltpu.CompilerParams(
            dimension_semantics=("parallel",)),
        cost_estimate=cost,
    )(x_flat, w1t, b1r, w2t, b2r, w3t, b3r, w4t_pad, b4r_pad)

    out = out_pad[:M, :c4].reshape(B, N, c4)
    return out


def _reference_forward(x, params, eps=1e-5):
    """Pure-JAX reference mirroring the PyTorch forward (BN in eval mode)."""
    def conv_bn_relu(h, w, b, gamma, beta, mean, var):
        y = jnp.einsum("oc,bcn->bon", w, h) + b[None, :, None]
        y = gamma[None, :, None] * (y - mean[None, :, None]) \
            / jnp.sqrt(var[None, :, None] + eps) + beta[None, :, None]
        return jnp.maximum(y, 0.0)

    h = conv_bn_relu(x, params["w1"], params["b1"], params["g1"],
                     params["be1"], params["m1"], params["v1"])
    h = conv_bn_relu(h, params["w2"], params["b2"], params["g2"],
                     params["be2"], params["m2"], params["v2"])
    h = conv_bn_relu(h, params["w3"], params["b3"], params["g3"],
                     params["be3"], params["m3"], params["v3"])
    y = jnp.einsum("oc,bcn->bon", params["w4"], h) + params["b4"][None, :, None]
    y = jnp.tanh(y)
    return jnp.transpose(y, (0, 2, 1))


def _make_params(key, nlatent):
    """Synthetic, deterministic parameters (no checkpoint)."""
    c0, c1, c2, c3, c4 = nlatent, nlatent, nlatent // 2, nlatent // 4, 3
    ks = jax.random.split(key, 20)

    def conv_init(kw, kb, c_out, c_in):
        bound = 1.0 / jnp.sqrt(c_in)
        w = jax.random.uniform(kw, (c_out, c_in), jnp.float32, -bound, bound)
        b = jax.random.uniform(kb, (c_out,), jnp.float32, -bound, bound)
        return w, b

    def bn_init(kg, kb, km, kv, c):
        g = jax.random.uniform(kg, (c,), jnp.float32, 0.5, 1.5)
        be = 0.1 * jax.random.normal(kb, (c,), jnp.float32)
        m = 0.1 * jax.random.normal(km, (c,), jnp.float32)
        v = jax.random.uniform(kv, (c,), jnp.float32, 0.5, 1.5)
        return g, be, m, v

    w1, b1 = conv_init(ks[0], ks[1], c1, c0)
    w2, b2 = conv_init(ks[2], ks[3], c2, c1)
    w3, b3 = conv_init(ks[4], ks[5], c3, c2)
    w4, b4 = conv_init(ks[6], ks[7], c4, c3)
    g1, be1, m1, v1 = bn_init(ks[8], ks[9], ks[10], ks[11], c1)
    g2, be2, m2, v2 = bn_init(ks[12], ks[13], ks[14], ks[15], c2)
    g3, be3, m3, v3 = bn_init(ks[16], ks[17], ks[18], ks[19], c3)

    return dict(w1=w1, b1=b1, g1=g1, be1=be1, m1=m1, v1=v1,
                w2=w2, b2=b2, g2=g2, be2=be2, m2=m2, v2=v2,
                w3=w3, b3=b3, g3=g3, be3=be3, m3=m3, v3=v3,
                w4=w4, b4=b4)


if __name__ == "__main__":
    # Small shapes consistent with the module: nlatent must be divisible by 4.
    nlatent = 256
    B, N = 2, 512

    key = jax.random.PRNGKey(0)
    k_x, k_p = jax.random.split(key)
    x = jax.random.normal(k_x, (B, nlatent, N), dtype=jnp.float32)
    params = _make_params(k_p, nlatent)

    out = mlp_adj_forward(x, params)
    jax.block_until_ready(out)

    # Correctness check against the pure-JAX reference.
    out_ref = _reference_forward(x, params)
    assert out.shape == (B, N, 3)
    assert jnp.allclose(out, out_ref, atol=1e-4, rtol=1e-4), \
        float(jnp.max(jnp.abs(out - out_ref)))

    print("KERNEL_OK")
</pallas_src>

<mosaic_0001>
module attributes {stable_mosaic.version = 11 : i64} {
  func.func @_mlp_adj_kernel(%arg0: i32, %arg1: memref<256x256xf32, #tpu.memory_space<vmem>>, %arg2: memref<256x256xf32, #tpu.memory_space<vmem>>, %arg3: memref<1x256xf32, #tpu.memory_space<vmem>>, %arg4: memref<256x128xf32, #tpu.memory_space<vmem>>, %arg5: memref<1x128xf32, #tpu.memory_space<vmem>>, %arg6: memref<128x64xf32, #tpu.memory_space<vmem>>, %arg7: memref<1x64xf32, #tpu.memory_space<vmem>>, %arg8: memref<64x128xf32, #tpu.memory_space<vmem>>, %arg9: memref<1x128xf32, #tpu.memory_space<vmem>>, %arg10: memref<256x128xf32, #tpu.memory_space<vmem>>) attributes {dimension_semantics = [#tpu.dimension_semantics<parallel>], iteration_bounds = array<i64: 4>, scalar_prefetch = 0 : i64, scratch_operands = 0 : i64, tpu.core_type = #tpu.core_type<tc>, window_params = [{transform_indices = @transform_0, window_bounds = array<i64: 256, 256>}, {pipeline_mode = #tpu.pipeline_mode<synchronous>, transform_indices = @transform_1, window_bounds = array<i64: 256, 256>}, {pipeline_mode = #tpu.pipeline_mode<synchronous>, transform_indices = @transform_2, window_bounds = array<i64: 1, 256>}, {pipeline_mode = #tpu.pipeline_mode<synchronous>, transform_indices = @transform_3, window_bounds = array<i64: 256, 128>}, {pipeline_mode = #tpu.pipeline_mode<synchronous>, transform_indices = @transform_4, window_bounds = array<i64: 1, 128>}, {pipeline_mode = #tpu.pipeline_mode<synchronous>, transform_indices = @transform_5, window_bounds = array<i64: 128, 64>}, {pipeline_mode = #tpu.pipeline_mode<synchronous>, transform_indices = @transform_6, window_bounds = array<i64: 1, 64>}, {pipeline_mode = #tpu.pipeline_mode<synchronous>, transform_indices = @transform_7, window_bounds = array<i64: 64, 128>}, {pipeline_mode = #tpu.pipeline_mode<synchronous>, transform_indices = @transform_8, window_bounds = array<i64: 1, 128>}, {transform_indices = @transform_9, window_bounds = array<i64: 256, 128>}]} {
    %c0 = arith.constant 0 : index
    %c0_0 = arith.constant 0 : index
    %0 = vector.load %arg1[%c0, %c0_0] : memref<256x256xf32, #tpu.memory_space<vmem>>, vector<256x256xf32>
    %c0_1 = arith.constant 0 : index
    %c0_2 = arith.constant 0 : index
    %1 = vector.load %arg2[%c0_1, %c0_2] : memref<256x256xf32, #tpu.memory_space<vmem>>, vector<256x256xf32>
    %cst = arith.constant dense<0.000000e+00> : vector<256x256xf32>
    %2 = tpu.matmul %0, %1, %cst {dimension_numbers = #tpu.dot_dimension_numbers<[1], [0], [0], [1], [0, 0, 1, 1], [], []>} : vector<256x256xf32>, vector<256x256xf32>, vector<256x256xf32> -> vector<256x256xf32>
    %c0_3 = arith.constant 0 : index
    %c0_4 = arith.constant 0 : index
    %3 = vector.load %arg3[%c0_3, %c0_4] : memref<1x256xf32, #tpu.memory_space<vmem>>, vector<1x256xf32>
    %4 = vector.broadcast %3 : vector<1x256xf32> to vector<256x256xf32>
    %5 = arith.addf %2, %4 : vector<256x256xf32>
    %cst_5 = arith.constant 0.000000e+00 : f32
    %6 = vector.broadcast %cst_5 : f32 to vector<256x256xf32>
    %7 = arith.maximumf %5, %6 : vector<256x256xf32>
    %c0_6 = arith.constant 0 : index
    %c0_7 = arith.constant 0 : index
    %8 = vector.load %arg4[%c0_6, %c0_7] : memref<256x128xf32, #tpu.memory_space<vmem>>, vector<256x128xf32>
    %cst_8 = arith.constant dense<0.000000e+00> : vector<256x128xf32>
    %9 = tpu.matmul %7, %8, %cst_8 {dimension_numbers = #tpu.dot_dimension_numbers<[1], [0], [0], [1], [0, 0, 1, 1], [], []>} : vector<256x256xf32>, vector<256x128xf32>, vector<256x128xf32> -> vector<256x128xf32>
    %c0_9 = arith.constant 0 : index
    %c0_10 = arith.constant 0 : index
    %10 = vector.load %arg5[%c0_9, %c0_10] : memref<1x128xf32, #tpu.memory_space<vmem>>, vector<1x128xf32>
    %11 = vector.broadcast %10 : vector<1x128xf32> to vector<256x128xf32>
    %12 = arith.addf %9, %11 : vector<256x128xf32>
    %cst_11 = arith.constant 0.000000e+00 : f32
    %13 = vector.broadcast %cst_11 : f32 to vector<256x128xf32>
    %14 = arith.maximumf %12, %13 : vector<256x128xf32>
    %c0_12 = arith.constant 0 : index
    %c0_13 = arith.constant 0 : index
    %15 = vector.load %arg6[%c0_12, %c0_13] : memref<128x64xf32, #tpu.memory_space<vmem>>, vector<128x64xf32>
    %cst_14 = arith.constant dense<0.000000e+00> : vector<256x64xf32>
    %16 = tpu.matmul %14, %15, %cst_14 {dimension_numbers = #tpu.dot_dimension_numbers<[1], [0], [0], [1], [0, 0, 1, 1], [], []>} : vector<256x128xf32>, vector<128x64xf32>, vector<256x64xf32> -> vector<256x64xf32>
    %c0_15 = arith.constant 0 : index
    %c0_16 = arith.constant 0 : index
    %17 = vector.load %arg7[%c0_15, %c0_16] : memref<1x64xf32, #tpu.memory_space<vmem>>, vector<1x64xf32>
    %18 = vector.broadcast %17 : vector<1x64xf32> to vector<256x64xf32>
    %19 = arith.addf %16, %18 : vector<256x64xf32>
    %cst_17 = arith.constant 0.000000e+00 : f32
    %20 = vector.broadcast %cst_17 : f32 to vector<256x64xf32>
    %21 = arith.maximumf %19, %20 : vector<256x64xf32>
    %c0_18 = arith.constant 0 : index
    %c0_19 = arith.constant 0 : index
    %22 = vector.load %arg8[%c0_18, %c0_19] : memref<64x128xf32, #tpu.memory_space<vmem>>, vector<64x128xf32>
    %cst_20 = arith.constant dense<0.000000e+00> : vector<256x128xf32>
    %23 = tpu.matmul %21, %22, %cst_20 {dimension_numbers = #tpu.dot_dimension_numbers<[1], [0], [0], [1], [0, 0, 1, 1], [], []>} : vector<256x64xf32>, vector<64x128xf32>, vector<256x128xf32> -> vector<256x128xf32>
    %c0_21 = arith.constant 0 : index
    %c0_22 = arith.constant 0 : index
    %24 = vector.load %arg9[%c0_21, %c0_22] : memref<1x128xf32, #tpu.memory_space<vmem>>, vector<1x128xf32>
    %25 = vector.broadcast %24 : vector<1x128xf32> to vector<256x128xf32>
    %26 = arith.addf %23, %25 : vector<256x128xf32>
    %27 = math.tanh %26 : vector<256x128xf32>
    %c0_23 = arith.constant 0 : index
    %c0_24 = arith.constant 0 : index
    %28 = vector.load %arg10[%c0_23, %c0_24] : memref<256x128xf32, #tpu.memory_space<vmem>>, vector<256x128xf32>
    tpu.vector_store %arg10[%c0_23, %c0_24], %27 {strides = array<i32>} : memref<256x128xf32, #tpu.memory_space<vmem>>, vector<256x128xf32>,
    return
  }
  func.func @transform_0(%arg0: i32) -> (i32, i32) {
    %c0_i32 = arith.constant 0 : i32
    %c0_i32_0 = arith.constant 0 : i32
    return %arg0, %c0_i32 : i32, i32
  }
  func.func @transform_1(%arg0: i32) -> (i32, i32) {
    %c0_i32 = arith.constant 0 : i32
    %c0_i32_0 = arith.constant 0 : i32
    %c0_i32_1 = arith.constant 0 : i32
    return %c0_i32, %c0_i32_0 : i32, i32
  }
  func.func @transform_2(%arg0: i32) -> (i32, i32) {
    %c0_i32 = arith.constant 0 : i32
    %c0_i32_0 = arith.constant 0 : i32
    %c0_i32_1 = arith.constant 0 : i32
    return %c0_i32, %c0_i32_0 : i32, i32
  }
  func.func @transform_3(%arg0: i32) -> (i32, i32) {
    %c0_i32 = arith.constant 0 : i32
    %c0_i32_0 = arith.constant 0 : i32
    %c0_i32_1 = arith.constant 0 : i32
    return %c0_i32, %c0_i32_0 : i32, i32
  }
  func.func @transform_4(%arg0: i32) -> (i32, i32) {
    %c0_i32 = arith.constant 0 : i32
    %c0_i32_0 = arith.constant 0 : i32
    %c0_i32_1 = arith.constant 0 : i32
    return %c0_i32, %c0_i32_0 : i32, i32
  }
  func.func @transform_5(%arg0: i32) -> (i32, i32) {
    %c0_i32 = arith.constant 0 : i32
    %c0_i32_0 = arith.constant 0 : i32
    %c0_i32_1 = arith.constant 0 : i32
    return %c0_i32, %c0_i32_0 : i32, i32
  }
  func.func @transform_6(%arg0: i32) -> (i32, i32) {
    %c0_i32 = arith.constant 0 : i32
    %c0_i32_0 = arith.constant 0 : i32
    %c0_i32_1 = arith.constant 0 : i32
    return %c0_i32, %c0_i32_0 : i32, i32
  }
  func.func @transform_7(%arg0: i32) -> (i32, i32) {
    %c0_i32 = arith.constant 0 : i32
    %c0_i32_0 = arith.constant 0 : i32
    %c0_i32_1 = arith.constant 0 : i32
    return %c0_i32, %c0_i32_0 : i32, i32
  }
  func.func @transform_8(%arg0: i32) -> (i32, i32) {
    %c0_i32 = arith.constant 0 : i32
    %c0_i32_0 = arith.constant 0 : i32
    %c0_i32_1 = arith.constant 0 : i32
    return %c0_i32, %c0_i32_0 : i32, i32
  }
  func.func @transform_9(%arg0: i32) -> (i32, i32) {
    %c0_i32 = arith.constant 0 : i32
    %c0_i32_0 = arith.constant 0 : i32
    return %arg0, %c0_i32 : i32, i32
  }
}

</mosaic_0001>

<llo_original>
// kernel: tpu_custom_call.1
$region0: #{tpu_custom_call.1}
  #allocation0 [shape = 'u32[]', space=smem, size = 0x4, offset = 0x4, fixed_abs, tag = 'smem constant byte address 0x4 - core index']
  #allocation1 [shape = 'u32[144,128]{1,0:T(1,128)}', space=vmem, size = 0x12000, scoped, tag = 'internal scratch']
  %s0 = inlined_call_operand.hbm [shape: f32[1024,256], index: 0, kind: input, shape index: {}]
  %s1 = inlined_call_operand.hbm [shape: f32[256,256], index: 1, kind: input, shape index: {}]
  %s2 = inlined_call_operand.vmem [shape: f32[1,256], index: 2, kind: input, shape index: {}]
  %s3 = inlined_call_operand.hbm [shape: f32[256,128], index: 3, kind: input, shape index: {}]
  %s4 = inlined_call_operand.vmem [shape: f32[1,128], index: 4, kind: input, shape index: {}]
  %s5 = inlined_call_operand.vmem [shape: f32[128,64], index: 5, kind: input, shape index: {}]
  %s6 = inlined_call_operand.vmem [shape: f32[1,64], index: 6, kind: input, shape index: {}]
  %s7 = inlined_call_operand.vmem [shape: f32[64,128], index: 7, kind: input, shape index: {}]
  %s8 = inlined_call_operand.vmem [shape: f32[1,128], index: 8, kind: input, shape index: {}]
  %s9 = inlined_call_operand.hbm [shape: f32[1024,128], index: 9, kind: output, shape index: {}]
  %s10 = sld [smem:[#allocation0]]
  $region81: #{tpu_custom_call.1} parent=0
    _
  %s12 = ssub.s32 1, %s10
  %s13 = scalar_select 0, %s12, %s10
  $region1: #{tpu_custom_call.1} parent=0
    #allocation2 [shape = 'u8[524288]{0}', space=vmem, size = 0x80000, scoped, tag = 'input window, operand 0']
    #allocation3 [shape = 's32[2]{0}', space=sflag, size = 0x8, scoped, tag = 'scoped memory for tpu_custom_call.1']
    #allocation4 [shape = 's32[2]{0}', space=sflag, size = 0x8, scoped, tag = 'scoped memory for tpu_custom_call.1']
    #allocation5 [shape = 'u8[262144]{0}', space=vmem, size = 0x40000, scoped, tag = 'input window, operand 1, single buffered']
    #allocation6 [shape = 's32[1]{0}', space=sflag, size = 0x4, scoped, tag = 'scoped memory for tpu_custom_call.1']
    #allocation7 [shape = 'u8[131072]{0}', space=vmem, size = 0x20000, scoped, tag = 'input window, operand 3, single buffered']
    #allocation8 [shape = 'u8[262144]{0}', space=vmem, size = 0x40000, scoped, tag = 'output window, operand 0']
    %14 = vsyncpa [#allocation3], 0
    %s15 = scalar_lea.sflag [#allocation3], 1
    %16 = vsyncpa %s15, 0
    %17 = vsyncpa [#allocation6], 0
    %18 = vsyncpa [#allocation4], 0
    %s19 = scalar_lea.sflag [#allocation4], 1
    %20 = vsyncpa %s19, 0
    loop: start=0, step=1, limit=6
    $region2: #{tpu_custom_call.1} parent=1 // loop_pre_header
      _
    $region3: #{tpu_custom_call.1} parent=1 // loop_header
      %s22 = sphi 0, %s26
      %p23 = scmp.ge.s32.totalorder %s22, 6
      %s32 = sphi 0, %s34
      %s35 = sphi 0, %s32
      %s36 = sphi 0, %s35
      %s52 = sphi 0, %s36
      %s56 = sphi 0, %s56
      %s58 = sphi 0, %s56
      %s59 = sphi 0, %s58
      %s73 = sphi 0, %s59
      %s77 = sphi 0, %s77
      %s79 = sphi 0, %s77
      %s80 = sphi 0, %s79
      %s94 = sphi 0, %s80
      %s98 = sphi 0, %s98
      %s100 = sphi 0, %s98
      %s101 = sphi 0, %s100
      %s115 = sphi 0, %s101
      %s119 = sphi 0, %s119
      %s121 = sphi 0, %s119
      %s122 = sphi 0, %s121
      %s136 = sphi 0, %s122
      %s140 = sphi 0, %s140
      %s142 = sphi 0, %s140
      %s143 = sphi 0, %s142
      %s157 = sphi 0, %s143
      %s161 = sphi 0, %s161
      %s163 = sphi 0, %s161
      %s164 = sphi 0, %s163
      %s178 = sphi 0, %s164
      %s182 = sphi 0, %s182
      %s184 = sphi 0, %s182
      %s185 = sphi 0, %s184
      %s199 = sphi 0, %s185
      %s203 = sphi 0, %s203
      %s205 = sphi 0, %s203
      %s206 = sphi 0, %s205
      %s220 = sphi 0, %s206
      %s226 = sphi 0, %s228
      %s229 = sphi 0, %s226
      %s230 = sphi 0, %s229
      %s246 = sphi 0, %s230
    $region4: #{tpu_custom_call.1} parent=1 // loop_header_branch
      %25 = sbr.rel (%p23) target = $region8
    $region5: #{tpu_custom_call.1} parent=1 // loop_body
      %s27 = ssub.s32 %s22, 1
      %s28 = ssub.s32 %s22, 2
      %s29 = sadd.s32 %s22, 1
      %s30 = ssub.s32 %s22, %s29
      %p31 = scmp.eq.s32.totalorder %s30, 0
      %s33 = sadd.s32 %s32, 1
      %s34 = scalar_select %p31, %s32, %s33
      %p37 = pneg %p31
      %p38 = scmp.eq.s32.totalorder %s22, 3
      %p39 = por %p37, %p38
      %p40 = scmp.ne.s32.totalorder %s32, %s35
      %p41 = scmp.eq.s32.totalorder %s22, 0
      %p42 = por %p40, %p41
      %p43 = scmp.ne.s32.totalorder %s32, %s35
      %p44 = scmp.eq.s32.totalorder %s27, 3
      %p45 = por %p43, %p44
      %p46 = scmp.ne.s32.totalorder %s35, %s36
      %p47 = scmp.eq.s32.totalorder %s27, 0
      %p48 = por %p46, %p47
      %p49 = scmp.ne.s32.totalorder %s35, %s36
      %p50 = scmp.eq.s32.totalorder %s28, 3
      %p51 = por %p49, %p50
      %p53 = scmp.ne.s32.totalorder %s36, %s52
      %p54 = scmp.eq.s32.totalorder %s28, 0
      %p55 = por %p53, %p54
      %s57 = sadd.s32 %s56, 1
      %p60 = scmp.eq.s32.totalorder %s22, 3
      %p61 = scmp.ne.s32.totalorder %s56, %s58
      %p62 = scmp.eq.s32.totalorder %s22, 0
      %p63 = por %p61, %p62
      %p64 = scmp.ne.s32.totalorder %s56, %s58
      %p65 = scmp.eq.s32.totalorder %s27, 3
      %p66 = por %p64, %p65
      %p67 = scmp.ne.s32.totalorder %s58, %s59
      %p68 = scmp.eq.s32.totalorder %s27, 0
      %p69 = por %p67, %p68
      %p70 = scmp.ne.s32.totalorder %s58, %s59
      %p71 = scmp.eq.s32.totalorder %s28, 3
      %p72 = por %p70, %p71
      %p74 = scmp.ne.s32.totalorder %s59, %s73
      %p75 = scmp.eq.s32.totalorder %s28, 0
      %p76 = por %p74, %p75
      %s78 = sadd.s32 %s77, 1
      %p81 = scmp.eq.s32.totalorder %s22, 3
      %p82 = scmp.ne.s32.totalorder %s77, %s79
      %p83 = scmp.eq.s32.totalorder %s22, 0
      %p84 = por %p82, %p83
      %p85 = scmp.ne.s32.totalorder %s77, %s79
      %p86 = scmp.eq.s32.totalorder %s27, 3
      %p87 = por %p85, %p86
      %p88 = scmp.ne.s32.totalorder %s79, %s80
      %p89 = scmp.eq.s32.totalorder %s27, 0
      %p90 = por %p88, %p89
      %p91 = scmp.ne.s32.totalorder %s79, %s80
      %p92 = scmp.eq.s32.totalorder %s28, 3
      %p93 = por %p91, %p92
      %p95 = scmp.ne.s32.totalorder %s80, %s94
      %p96 = scmp.eq.s32.totalorder %s28, 0
      %p97 = por %p95, %p96
      %s99 = sadd.s32 %s98, 1
      %p102 = scmp.eq.s32.totalorder %s22, 3
      %p103 = scmp.ne.s32.totalorder %s98, %s100
      %p104 = scmp.eq.s32.totalorder %s22, 0
      %p105 = por %p103, %p104
      %p106 = scmp.ne.s32.totalorder %s98, %s100
      %p107 = scmp.eq.s32.totalorder %s27, 3
      %p108 = por %p106, %p107
      %p109 = scmp.ne.s32.totalorder %s100, %s101
      %p110 = scmp.eq.s32.totalorder %s27, 0
      %p111 = por %p109, %p110
      %p112 = scmp.ne.s32.totalorder %s100, %s101
      %p113 = scmp.eq.s32.totalorder %s28, 3
      %p114 = por %p112, %p113
      %p116 = scmp.ne.s32.totalorder %s101, %s115
      %p117 = scmp.eq.s32.totalorder %s28, 0
      %p118 = por %p116, %p117
      %s120 = sadd.s32 %s119, 1
      %p123 = scmp.eq.s32.totalorder %s22, 3
      %p124 = scmp.ne.s32.totalorder %s119, %s121
      %p125 = scmp.eq.s32.totalorder %s22, 0
      %p126 = por %p124, %p125
      %p127 = scmp.ne.s32.totalorder %s119, %s121
      %p128 = scmp.eq.s32.totalorder %s27, 3
      %p129 = por %p127, %p128
      %p130 = scmp.ne.s32.totalorder %s121, %s122
      %p131 = scmp.eq.s32.totalorder %s27, 0
      %p132 = por %p130, %p131
      %p133 = scmp.ne.s32.totalorder %s121, %s122
      %p134 = scmp.eq.s32.totalorder %s28, 3
      %p135 = por %p133, %p134
      %p137 = scmp.ne.s32.totalorder %s122, %s136
      %p138 = scmp.eq.s32.totalorder %s28, 0
      %p139 = por %p137, %p138
      %s141 = sadd.s32 %s140, 1
      %p144 = scmp.eq.s32.totalorder %s22, 3
      %p145 = scmp.ne.s32.totalorder %s140, %s142
      %p146 = scmp.eq.s32.totalorder %s22, 0
      %p147 = por %p145, %p146
      %p148 = scmp.ne.s32.totalorder %s140, %s142
      %p149 = scmp.eq.s32.totalorder %s27, 3
      %p150 = por %p148, %p149
      %p151 = scmp.ne.s32.totalorder %s142, %s143
      %p152 = scmp.eq.s32.totalorder %s27, 0
      %p153 = por %p151, %p152
      %p154 = scmp.ne.s32.totalorder %s142, %s143
      %p155 = scmp.eq.s32.totalorder %s28, 3
      %p156 = por %p154, %p155
      %p158 = scmp.ne.s32.totalorder %s143, %s157
      %p159 = scmp.eq.s32.totalorder %s28, 0
      %p160 = por %p158, %p159
      %s162 = sadd.s32 %s161, 1
      %p165 = scmp.eq.s32.totalorder %s22, 3
      %p166 = scmp.ne.s32.totalorder %s161, %s163
      %p167 = scmp.eq.s32.totalorder %s22, 0
      %p168 = por %p166, %p167
      %p169 = scmp.ne.s32.totalorder %s161, %s163
      %p170 = scmp.eq.s32.totalorder %s27, 3
      %p171 = por %p169, %p170
      %p172 = scmp.ne.s32.totalorder %s163, %s164
      %p173 = scmp.eq.s32.totalorder %s27, 0
      %p174 = por %p172, %p173
      %p175 = scmp.ne.s32.totalorder %s163, %s164
      %p176 = scmp.eq.s32.totalorder %s28, 3
      %p177 = por %p175, %p176
      %p179 = scmp.ne.s32.totalorder %s164, %s178
      %p180 = scmp.eq.s32.totalorder %s28, 0
      %p181 = por %p179, %p180
      %s183 = sadd.s32 %s182, 1
      %p186 = scmp.eq.s32.totalorder %s22, 3
      %p187 = scmp.ne.s32.totalorder %s182, %s184
      %p188 = scmp.eq.s32.totalorder %s22, 0
      %p189 = por %p187, %p188
      %p190 = scmp.ne.s32.totalorder %s182, %s184
      %p191 = scmp.eq.s32.totalorder %s27, 3
      %p192 = por %p190, %p191
      %p193 = scmp.ne.s32.totalorder %s184, %s185
      %p194 = scmp.eq.s32.totalorder %s27, 0
      %p195 = por %p193, %p194
      %p196 = scmp.ne.s32.totalorder %s184, %s185
      %p197 = scmp.eq.s32.totalorder %s28, 3
      %p198 = por %p196, %p197
      %p200 = scmp.ne.s32.totalorder %s185, %s199
      %p201 = scmp.eq.s32.totalorder %s28, 0
      %p202 = por %p200, %p201
      %s204 = sadd.s32 %s203, 1
      %p207 = scmp.eq.s32.totalorder %s22, 3
      %p208 = scmp.ne.s32.totalorder %s203, %s205
      %p209 = scmp.eq.s32.totalorder %s22, 0
      %p210 = por %p208, %p209
      %p211 = scmp.ne.s32.totalorder %s203, %s205
      %p212 = scmp.eq.s32.totalorder %s27, 3
      %p213 = por %p211, %p212
      %p214 = scmp.ne.s32.totalorder %s205, %s206
      %p215 = scmp.eq.s32.totalorder %s27, 0
      %p216 = por %p214, %p215
      %p217 = scmp.ne.s32.totalorder %s205, %s206
      %p218 = scmp.eq.s32.totalorder %s28, 3
      %p219 = por %p217, %p218
      %p221 = scmp.ne.s32.totalorder %s206, %s220
      %p222 = scmp.eq.s32.totalorder %s28, 0
      %p223 = por %p221, %p222
      %s224 = ssub.s32 %s22, %s29
      %p225 = scmp.eq.s32.totalorder %s224, 0
      %s227 = sadd.s32 %s226, 1
      %s228 = scalar_select %p225, %s226, %s227
      %p231 = pneg %p225
      %p232 = scmp.eq.s32.totalorder %s22, 3
      %p233 = por %p231, %p232
      %p234 = scmp.ne.s32.totalorder %s226, %s229
      %p235 = scmp.eq.s32.totalorder %s22, 0
      %p236 = por %p234, %p235
      %p237 = scmp.ne.s32.totalorder %s226, %s229
      %p238 = scmp.eq.s32.totalorder %s27, 3
      %p239 = por %p237, %p238
      %p240 = scmp.ne.s32.totalorder %s229, %s230
      %p241 = scmp.eq.s32.totalorder %s27, 0
      %p242 = por %p240, %p241
      %p243 = scmp.ne.s32.totalorder %s229, %s230
      %p244 = scmp.eq.s32.totalorder %s28, 3
      %p245 = por %p243, %p244
      %p247 = scmp.ne.s32.totalorder %s230, %s246
      %p248 = scmp.eq.s32.totalorder %s28, 0
      %p249 = por %p247, %p248
      %p250 = scmp.le.s32.totalorder 1, %s22
      %p251 = scmp.lt.s32.totalorder %s22, 5
      %p252 = pnand %p250, %p251
      %p253 = pneg %p252
      // Predicated region
      $region9: #{tpu_custom_call.1} parent=5 // pred_check
        _
      $region10: #{tpu_custom_call.1} parent=5 // pred_check_branch
        %255 = sbr.rel (%p252) target = $region12
      $region11: #{tpu_custom_call.1} parent=5 // pred_region
        %s256 = ssub.s32 %s22, 1
        // Predicated region
        $region13: #{tpu_custom_call.1} parent=11 // pred_check
          %p257 = pneg %p69
        $region14: #{tpu_custom_call.1} parent=11 // pred_check_branch
          %259 = sbr.rel (%p257) target = $region16
        $region15: #{tpu_custom_call.1} parent=11 // pred_region
          %s261 = ssub.s32 8192, 8192
          %262 = vsyncadd [#allocation6], %s261
          %s263 = sshll.u32 [#allocation5], 4
          %s264 = int_to_ptr.vmem [resolvable:$true] %s263
          %269 = dma.hbm_to_vmem [thread:$0]  %s1, 8192, %s264, [#allocation6], 256, 256, 16
        $region16: #{tpu_custom_call.1} parent=11 // pred_fallthru
          _
        // Predicated region
        $region17: #{tpu_custom_call.1} parent=11 // pred_check
          %p270 = pneg %p90
        $region18: #{tpu_custom_call.1} parent=11 // pred_check_branch
          %272 = sbr.rel (%p270) target = $region20
        $region19: #{tpu_custom_call.1} parent=11 // pred_region
          _
        $region20: #{tpu_custom_call.1} parent=11 // pred_fallthru
          _
        // Predicated region
        $region21: #{tpu_custom_call.1} parent=11 // pred_check
          %p273 = pneg %p111
        $region22: #{tpu_custom_call.1} parent=11 // pred_check_branch
          %275 = sbr.rel (%p273) target = $region24
        $region23: #{tpu_custom_call.1} parent=11 // pred_region
          %s277 = ssub.s32 4096, 4096
          %278 = vsyncadd [#allocation6], %s277
          %s279 = sshll.u32 [#allocation7], 4
          %s280 = int_to_ptr.vmem [resolvable:$true] %s279
          %285 = dma.hbm_to_vmem [thread:$0]  %s3, 4096, %s280, [#allocation6], 128, 128, 8
        $region24: #{tpu_custom_call.1} parent=11 // pred_fallthru
          _
        // Predicated region
        $region25: #{tpu_custom_call.1} parent=11 // pred_check
          %p286 = pneg %p132
        $region26: #{tpu_custom_call.1} parent=11 // pred_check_branch
          %288 = sbr.rel (%p286) target = $region28
        $region27: #{tpu_custom_call.1} parent=11 // pred_region
          _
        $region28: #{tpu_custom_call.1} parent=11 // pred_fallthru
          _
        // Predicated region
        $region29: #{tpu_custom_call.1} parent=11 // pred_check
          %p289 = pneg %p153
        $region30: #{tpu_custom_call.1} parent=11 // pred_check_branch
          %291 = sbr.rel (%p289) target = $region32
        $region31: #{tpu_custom_call.1} parent=11 // pred_region
          _
        $region32: #{tpu_custom_call.1} parent=11 // pred_fallthru
          _
        // Predicated region
        $region33: #{tpu_custom_call.1} parent=11 // pred_check
          %p292 = pneg %p174
        $region34: #{tpu_custom_call.1} parent=11 // pred_check_branch
          %294 = sbr.rel (%p292) target = $region36
        $region35: #{tpu_custom_call.1} parent=11 // pred_region
          _
        $region36: #{tpu_custom_call.1} parent=11 // pred_fallthru
          _
        // Predicated region
        $region37: #{tpu_custom_call.1} parent=11 // pred_check
          %p295 = pneg %p195
        $region38: #{tpu_custom_call.1} parent=11 // pred_check_branch
          %297 = sbr.rel (%p295) target = $region40
        $region39: #{tpu_custom_call.1} parent=11 // pred_region
          _
        $region40: #{tpu_custom_call.1} parent=11 // pred_fallthru
          _
        // Predicated region
        $region41: #{tpu_custom_call.1} parent=11 // pred_check
          %p298 = pneg %p216
        $region42: #{tpu_custom_call.1} parent=11 // pred_check_branch
          %300 = sbr.rel (%p298) target = $region44
        $region43: #{tpu_custom_call.1} parent=11 // pred_region
          _
        $region44: #{tpu_custom_call.1} parent=11 // pred_fallthru
          _
      $region12: #{tpu_custom_call.1} parent=5 // pred_fallthru
        _
      %p301 = scmp.lt.s32.totalorder %s22, 4
      // Predicated region
      $region45: #{tpu_custom_call.1} parent=5 // pred_check
        %p302 = pneg %p301
      $region46: #{tpu_custom_call.1} parent=5 // pred_check_branch
        %304 = sbr.rel (%p302) target = $region48
      $region47: #{tpu_custom_call.1} parent=5 // pred_region
        // Predicated region
        $region49: #{tpu_custom_call.1} parent=47 // pred_check
          %p305 = pneg %p42
        $region50: #{tpu_custom_call.1} parent=47 // pred_check_branch
          %307 = sbr.rel (%p305) target = $region52
        $region51: #{tpu_custom_call.1} parent=47 // pred_region
          %s308 = sand.u32 %s32, 1
          %s309 = scalar_lea.sflag [#allocation3], %s308
          %s310 = sand.u32 %s32, 1
          %s311 = smul.addr %s310, 512
          %s312 = scalar_lea.vmem [#allocation2], %s311
          %s313 = smul.u32 32, %s22
          %s315 = ssub.s32 8192, 8192
          %316 = vsyncadd %s309, %s315
          %s317 = smul.addr %s313, 2
          %s318 = smul.addr %s317, 128
          %s319 = scalar_lea.hbm %s0, %s318
          %s320 = sshll.u32 %s312, 4
          %s321 = int_to_ptr.vmem [resolvable:$true] %s320
          %326 = dma.hbm_to_vmem [thread:$0]  %s319, 8192, %s321, %s309, 256, 256, 16
        $region52: #{tpu_custom_call.1} parent=47 // pred_fallthru
          _
      $region48: #{tpu_custom_call.1} parent=5 // pred_fallthru
        _
      %p327 = scmp.le.s32.totalorder 1, %s22
      %p328 = scmp.lt.s32.totalorder %s22, 5
      %p329 = pnand %p327, %p328
      %p330 = pneg %p329
      // Predicated region
      $region53: #{tpu_custom_call.1} parent=5 // pred_check
        _
      $region54: #{tpu_custom_call.1} parent=5 // pred_check_branch
        %332 = sbr.rel (%p329) target = $region56
      $region55: #{tpu_custom_call.1} parent=5 // pred_region
        %s333 = ssub.s32 %s22, 1
        %s334 = sand.u32 %s35, 1
        %s335 = scalar_lea.sflag [#allocation3], %s334
        %s336 = sand.u32 %s35, 1
        %s337 = smul.addr %s336, 512
        %s338 = scalar_lea.vmem [#allocation2], %s337
        // Predicated region
        $region57: #{tpu_custom_call.1} parent=55 // pred_check
          %p339 = pneg %p48
        $region58: #{tpu_custom_call.1} parent=55 // pred_check_branch
          %341 = sbr.rel (%p339) target = $region60
        $region59: #{tpu_custom_call.1} parent=55 // pred_region
          %342 = dma.done %s335, 8192
        $region60: #{tpu_custom_call.1} parent=55 // pred_fallthru
          _
        // Predicated region
        $region61: #{tpu_custom_call.1} parent=55 // pred_check
          %p343 = pneg %p69
        $region62: #{tpu_custom_call.1} parent=55 // pred_check_branch
          %345 = sbr.rel (%p343) target = $region64
        $region63: #{tpu_custom_call.1} parent=55 // pred_region
          %346 = dma.done [#allocation6], 8192
        $region64: #{tpu_custom_call.1} parent=55 // pred_fallthru
          _
        // Predicated region
        $region65: #{tpu_custom_call.1} parent=55 // pred_check
          %p347 = pneg %p111
        $region66: #{tpu_custom_call.1} parent=55 // pred_check_branch
          %349 = sbr.rel (%p347) target = $region68
        $region67: #{tpu_custom_call.1} parent=55 // pred_region
          %350 = dma.done [#allocation6], 4096
        $region68: #{tpu_custom_call.1} parent=55 // pred_fallthru
          _
        %s351 = sand.u32 %s35, 1
        %s352 = scalar_lea.sflag [#allocation3], %s351
        %s353 = sand.u32 %s35, 1
        %s354 = smul.addr %s353, 512
        %s355 = scalar_lea.vmem [#allocation2], %s354
        %p356 = pneg %p48
        %p357 = pneg %p45
        %p358 = pneg %p69
        %p359 = pneg %p66
        %p360 = pneg %p90
        %p361 = pneg %p87
        %p362 = pneg %p111
        %p363 = pneg %p108
        %p364 = pneg %p132
        %p365 = pneg %p129
        %p366 = pneg %p153
        %p367 = pneg %p150
        %p368 = pneg %p174
        %p369 = pneg %p171
        %p370 = pneg %p195
        %p371 = pneg %p192
        %p372 = pneg %p216
        %p373 = pneg %p213
        %p374 = pneg %p242
        %p375 = pneg %p239
        %s376 = sand.u32 %s229, 1
        %s377 = scalar_lea.sflag [#allocation4], %s376
        %s378 = sand.u32 %s229, 1
        %s379 = smul.addr %s378, 256
        %s380 = scalar_lea.vmem [#allocation8], %s379
        %s381 = smul.u32 32, %s27
        %s382 = smul.u32 32, %s27
        %v383 = vld [vmem:[%s338] sm:$0xff]
        %v384 = vld [vmem:[%s338 + $0x8] sm:$0xff]
        %v385 = vld [vmem:[%s338 + $0x10] sm:$0xff]
        %v386 = vld [vmem:[%s338 + $0x18] sm:$0xff]
        %v387 = vld [vmem:[%s338 + $0x20] sm:$0xff]
        %v388 = vld [vmem:[%s338 + $0x28] sm:$0xff]
        %v389 = vld [vmem:[%s338 + $0x30] sm:$0xff]
        %v390 = vld [vmem:[%s338 + $0x38] sm:$0xff]
        %v391 = vld [vmem:[%s338 + $0x40] sm:$0xff]
        %v392 = vld [vmem:[%s338 + $0x48] sm:$0xff]
        %v393 = vld [vmem:[%s338 + $0x50] sm:$0xff]
        %v394 = vld [vmem:[%s338 + $0x58] sm:$0xff]
        %v395 = vld [vmem:[%s338 + $0x60] sm:$0xff]
        %v396 = vld [vmem:[%s338 + $0x68] sm:$0xff]
        %v397 = vld [vmem:[%s338 + $0x70] sm:$0xff]
        %v398 = vld [vmem:[%s338 + $0x78] sm:$0xff]
        %v399 = vld [vmem:[%s338 + $0x80] sm:$0xff]
        %v400 = vld [vmem:[%s338 + $0x88] sm:$0xff]
        %v401 = vld [vmem:[%s338 + $0x90] sm:$0xff]
        %v402 = vld [vmem:[%s338 + $0x98] sm:$0xff]
        %v403 = vld [vmem:[%s338 + $0xa0] sm:$0xff]
        %v404 = vld [vmem:[%s338 + $0xa8] sm:$0xff]
        %v405 = vld [vmem:[%s338 + $0xb0] sm:$0xff]
        %v406 = vld [vmem:[%s338 + $0xb8] sm:$0xff]
        %v407 = vld [vmem:[%s338 + $0xc0] sm:$0xff]
        %v408 = vld [vmem:[%s338 + $0xc8] sm:$0xff]
        %v409 = vld [vmem:[%s338 + $0xd0] sm:$0xff]
        %v410 = vld [vmem:[%s338 + $0xd8] sm:$0xff]
        %v411 = vld [vmem:[%s338 + $0xe0] sm:$0xff]
        %v412 = vld [vmem:[%s338 + $0xe8] sm:$0xff]
        %v413 = vld [vmem:[%s338 + $0xf0] sm:$0xff]
        %v414 = vld [vmem:[%s338 + $0xf8] sm:$0xff]
        %v415 = vld [vmem:[%s338 + $0x100] sm:$0xff]
        %v416 = vld [vmem:[%s338 + $0x108] sm:$0xff]
        %v417 = vld [vmem:[%s338 + $0x110] sm:$0xff]
        %v418 = vld [vmem:[%s338 + $0x118] sm:$0xff]
        %v419 = vld [vmem:[%s338 + $0x120] sm:$0xff]
        %v420 = vld [vmem:[%s338 + $0x128] sm:$0xff]
        %v421 = vld [vmem:[%s338 + $0x130] sm:$0xff]
        %v422 = vld [vmem:[%s338 + $0x138] sm:$0xff]
        %v423 = vld [vmem:[%s338 + $0x140] sm:$0xff]
        %v424 = vld [vmem:[%s338 + $0x148] sm:$0xff]
        %v425 = vld [vmem:[%s338 + $0x150] sm:$0xff]
        %v426 = vld [vmem:[%s338 + $0x158] sm:$0xff]
        %v427 = vld [vmem:[%s338 + $0x160] sm:$0xff]
        %v428 = vld [vmem:[%s338 + $0x168] sm:$0xff]
        %v429 = vld [vmem:[%s338 + $0x170] sm:$0xff]
        %v430 = vld [vmem:[%s338 + $0x178] sm:$0xff]
        %v431 = vld [vmem:[%s338 + $0x180] sm:$0xff]
        %v432 = vld [vmem:[%s338 + $0x188] sm:$0xff]
        %v433 = vld [vmem:[%s338 + $0x190] sm:$0xff]
        %v434 = vld [vmem:[%s338 + $0x198] sm:$0xff]
        %v435 = vld [vmem:[%s338 + $0x1a0] sm:$0xff]
        %v436 = vld [vmem:[%s338 + $0x1a8] sm:$0xff]
        %v437 = vld [vmem:[%s338 + $0x1b0] sm:$0xff]
        %v438 = vld [vmem:[%s338 + $0x1b8] sm:$0xff]
        %v439 = vld [vmem:[%s338 + $0x1c0] sm:$0xff]
        %v440 = vld [vmem:[%s338 + $0x1c8] sm:$0xff]
        %v441 = vld [vmem:[%s338 + $0x1d0] sm:$0xff]
        %v442 = vld [vmem:[%s338 + $0x1d8] sm:$0xff]
        %v443 = vld [vmem:[%s338 + $0x1e0] sm:$0xff]
        %v444 = vld [vmem:[%s338 + $0x1e8] sm:$0xff]
        %v445 = vld [vmem:[%s338 + $0x1f0] sm:$0xff]
        %v446 = vld [vmem:[%s338 + $0x1f8] sm:$0xff]
        %v447 = vld [vmem:[#allocation5] sm:$0xff]
        %v448 = vld [vmem:[#allocation5 + $0x8] sm:$0xff]
        %v449 = vld [vmem:[#allocation5 + $0x10] sm:$0xff]
        %v450 = vld [vmem:[#allocation5 + $0x18] sm:$0xff]
        %v451 = vld [vmem:[#allocation5 + $0x20] sm:$0xff]
        %v452 = vld [vmem:[#allocation5 + $0x28] sm:$0xff]
        %v453 = vld [vmem:[#allocation5 + $0x30] sm:$0xff]
        %v454 = vld [vmem:[#allocation5 + $0x38] sm:$0xff]
        %v455 = vld [vmem:[#allocation5 + $0x40] sm:$0xff]
        %v456 = vld [vmem:[#allocation5 + $0x48] sm:$0xff]
        %v457 = vld [vmem:[#allocation5 + $0x50] sm:$0xff]
        %v458 = vld [vmem:[#allocation5 + $0x58] sm:$0xff]
        %v459 = vld [vmem:[#allocation5 + $0x60] sm:$0xff]
        %v460 = vld [vmem:[#allocation5 + $0x68] sm:$0xff]
        %v461 = vld [vmem:[#allocation5 + $0x70] sm:$0xff]
        %v462 = vld [vmem:[#allocation5 + $0x78] sm:$0xff]
        %v463 = vld [vmem:[#allocation5 + $0x80] sm:$0xff]
        %v464 = vld [vmem:[#allocation5 + $0x88] sm:$0xff]
        %v465 = vld [vmem:[#allocation5 + $0x90] sm:$0xff]
        %v466 = vld [vmem:[#allocation5 + $0x98] sm:$0xff]
        %v467 = vld [vmem:[#allocation5 + $0xa0] sm:$0xff]
        %v468 = vld [vmem:[#allocation5 + $0xa8] sm:$0xff]
        %v469 = vld [vmem:[#allocation5 + $0xb0] sm:$0xff]
        %v470 = vld [vmem:[#allocation5 + $0xb8] sm:$0xff]
        %v471 = vld [vmem:[#allocation5 + $0xc0] sm:$0xff]
        %v472 = vld [vmem:[#allocation5 + $0xc8] sm:$0xff]
        %v473 = vld [vmem:[#allocation5 + $0xd0] sm:$0xff]
        %v474 = vld [vmem:[#allocation5 + $0xd8] sm:$0xff]
        %v475 = vld [vmem:[#allocation5 + $0xe0] sm:$0xff]
        %v476 = vld [vmem:[#allocation5 + $0xe8] sm:$0xff]
        %v477 = vld [vmem:[#allocation5 + $0xf0] sm:$0xff]
        %v478 = vld [vmem:[#allocation5 + $0xf8] sm:$0xff]
        %v479 = vld [vmem:[#allocation5 + $0x100] sm:$0xff]
        %v480 = vld [vmem:[#allocation5 + $0x108] sm:$0xff]
        %v481 = vld [vmem:[#allocation5 + $0x110] sm:$0xff]
        %v482 = vld [vmem:[#allocation5 + $0x118] sm:$0xff]
        %v483 = vld [vmem:[#allocation5 + $0x120] sm:$0xff]
        %v484 = vld [vmem:[#allocation5 + $0x128] sm:$0xff]
        %v485 = vld [vmem:[#allocation5 + $0x130] sm:$0xff]
        %v486 = vld [vmem:[#allocation5 + $0x138] sm:$0xff]
        %v487 = vld [vmem:[#allocation5 + $0x140] sm:$0xff]
        %v488 = vld [vmem:[#allocation5 + $0x148] sm:$0xff]
        %v489 = vld [vmem:[#allocation5 + $0x150] sm:$0xff]
        %v490 = vld [vmem:[#allocation5 + $0x158] sm:$0xff]
        %v491 = vld [vmem:[#allocation5 + $0x160] sm:$0xff]
        %v492 = vld [vmem:[#allocation5 + $0x168] sm:$0xff]
        %v493 = vld [vmem:[#allocation5 + $0x170] sm:$0xff]
        %v494 = vld [vmem:[#allocation5 + $0x178] sm:$0xff]
        %v495 = vld [vmem:[#allocation5 + $0x180] sm:$0xff]
        %v496 = vld [vmem:[#allocation5 + $0x188] sm:$0xff]
        %v497 = vld [vmem:[#allocation5 + $0x190] sm:$0xff]
        %v498 = vld [vmem:[#allocation5 + $0x198] sm:$0xff]
        %v499 = vld [vmem:[#allocation5 + $0x1a0] sm:$0xff]
        %v500 = vld [vmem:[#allocation5 + $0x1a8] sm:$0xff]
        %v501 = vld [vmem:[#allocation5 + $0x1b0] sm:$0xff]
        %v502 = vld [vmem:[#allocation5 + $0x1b8] sm:$0xff]
        %v503 = vld [vmem:[#allocation5 + $0x1c0] sm:$0xff]
        %v504 = vld [vmem:[#allocation5 + $0x1c8] sm:$0xff]
        %v505 = vld [vmem:[#allocation5 + $0x1d0] sm:$0xff]
        %v506 = vld [vmem:[#allocation5 + $0x1d8] sm:$0xff]
        %v507 = vld [vmem:[#allocation5 + $0x1e0] sm:$0xff]
        %v508 = vld [vmem:[#allocation5 + $0x1e8] sm:$0xff]
        %v509 = vld [vmem:[#allocation5 + $0x1f0] sm:$0xff]
        %v510 = vld [vmem:[#allocation5 + $0x1f8] sm:$0xff]
        %v511 = vld [vmem:[%s2] sm:$0x3]
        %v513 = vlaneseq
        %v514 = vshrl.u32 %v513, 7
        %v515 = vsub.s32 0, %v514
        %v516 = vrot.slane %v511, %v515
        %v517 = vlaneseq
        %v518 = vshrl.u32 %v517, 7
        %v519 = vsub.s32 1, %v518
        %v520 = vrot.slane %v511, %v519
        %523 = vmatprep.subr.mxu0 %v448
        %524 = vmatpush1.msra.mxu0 %v447
        %525 = vmatprep.subr.mxu0 %v450
        %526 = vmatpush1.msra.mxu0 %v449
        %527 = vmatprep.subr.mxu0 %v452
        %528 = vmatpush1.msra.mxu0 %v451
        %529 = vmatprep.subr.mxu0 %v454
        %530 = vmatpush1.msra.mxu0 %v453
        %531 = vmatprep.subr.mxu0 %v456
        %532 = vmatpush1.msra.mxu0 %v455
        %533 = vmatprep.subr.mxu0 %v458
        %534 = vmatpush1.msra.mxu0 %v457
        %535 = vmatprep.subr.mxu0 %v460
        %536 = vmatpush1.msra.mxu0 %v459
        %537 = vmatprep.subr.mxu0 %v462
        %538 = vmatpush1.msra.mxu0 %v461
        %539 = vmatprep.subr.mxu0 %v464
        %540 = vmatpush1.msra.mxu0 %v463
        %541 = vmatprep.subr.mxu0 %v466
        %542 = vmatpush1.msra.mxu0 %v465
        %543 = vmatprep.subr.mxu0 %v468
        %544 = vmatpush1.msra.mxu0 %v467
        %545 = vmatprep.subr.mxu0 %v470
        %546 = vmatpush1.msra.mxu0 %v469
        %547 = vmatprep.subr.mxu0 %v472
        %548 = vmatpush1.msra.mxu0 %v471
        %549 = vmatprep.subr.mxu0 %v474
        %550 = vmatpush1.msra.mxu0 %v473
        %551 = vmatprep.subr.mxu0 %v476
        %552 = vmatpush1.msra.mxu0 %v475
        %553 = vmatprep.subr.mxu0 %v478
        %554 = vmatpush1.msra.mxu0 %v477
        %555 = vmatprep.subr.mxu0 %v480
        %556 = vmatpush1.msra.mxu0 %v479
        %557 = vmatprep.subr.mxu0 %v482
        %558 = vmatpush1.msra.mxu0 %v481
        %559 = vmatprep.subr.mxu0 %v484
        %560 = vmatpush1.msra.mxu0 %v483
        %561 = vmatprep.subr.mxu0 %v486
        %562 = vmatpush1.msra.mxu0 %v485
        %563 = vmatprep.subr.mxu0 %v488
        %564 = vmatpush1.msra.mxu0 %v487
        %565 = vmatprep.subr.mxu0 %v490
        %566 = vmatpush1.msra.mxu0 %v489
        %567 = vmatprep.subr.mxu0 %v492
        %568 = vmatpush1.msra.mxu0 %v491
        %569 = vmatprep.subr.mxu0 %v494
        %570 = vmatpush1.msra.mxu0 %v493
        %571 = vmatprep.subr.mxu0 %v496
        %572 = vmatpush1.msra.mxu0 %v495
        %573 = vmatprep.subr.mxu0 %v498
        %574 = vmatpush1.msra.mxu0 %v497
        %575 = vmatprep.subr.mxu0 %v500
        %576 = vmatpush1.msra.mxu0 %v499
        %577 = vmatprep.subr.mxu0 %v502
        %578 = vmatpush1.msra.mxu0 %v501
        %579 = vmatprep.subr.mxu0 %v504
        %580 = vmatpush1.msra.mxu0 %v503
        %581 = vmatprep.subr.mxu0 %v506
        %582 = vmatpush1.msra.mxu0 %v505
        %583 = vmatprep.subr.mxu0 %v508
        %584 = vmatpush1.msra.mxu0 %v507
        %585 = vmatprep.subr.mxu0 %v510
        %586 = vmatpush1.msra.mxu0 %v509
        %587 = vmatprep.mubr.f32.mxu0 %v384
        %588 = vmatmul.mubr.f32.gmra.mrb[0].mxu0 %v383
        %v589 = vpop.f32.mrb[0].mxu0
        %v590 = vadd.f32 %v516, %v589
        %v591 = vpop.f32.mrb[0].mxu0
        %v592 = vadd.f32 %v520, %v591
        %593 = vmatprep.mubr.f32.mxu0 %v386
        %594 = vmatmul.mubr.f32.gmra.mrb[0].mxu0 %v385
        %v595 = vpop.f32.mrb[0].mxu0
        %v596 = vadd.f32 %v516, %v595
        %v597 = vpop.f32.mrb[0].mxu0
        %v598 = vadd.f32 %v520, %v597
        %599 = vmatprep.mubr.f32.mxu0 %v388
        %600 = vmatmul.mubr.f32.gmra.mrb[0].mxu0 %v387
        %v601 = vpop.f32.mrb[0].mxu0
        %v602 = vadd.f32 %v516, %v601
        %v603 = vpop.f32.mrb[0].mxu0
        %v604 = vadd.f32 %v520, %v603
        %605 = vmatprep.mubr.f32.mxu0 %v390
        %606 = vmatmul.mubr.f32.gmra.mrb[0].mxu0 %v389
        %v607 = vpop.f32.mrb[0].mxu0
        %v608 = vadd.f32 %v516, %v607
        %v609 = vpop.f32.mrb[0].mxu0
        %v610 = vadd.f32 %v520, %v609
        %611 = vmatprep.mubr.f32.mxu0 %v392
        %612 = vmatmul.mubr.f32.gmra.mrb[0].mxu0 %v391
        %v613 = vpop.f32.mrb[0].mxu0
        %v614 = vadd.f32 %v516, %v613
        %v615 = vpop.f32.mrb[0].mxu0
        %v616 = vadd.f32 %v520, %v615
        %617 = vmatprep.mubr.f32.mxu0 %v394
        %618 = vmatmul.mubr.f32.gmra.mrb[0].mxu0 %v393
        %v619 = vpop.f32.mrb[0].mxu0
        %v620 = vadd.f32 %v516, %v619
        %v621 = vpop.f32.mrb[0].mxu0
        %v622 = vadd.f32 %v520, %v621
        %623 = vmatprep.mubr.f32.mxu0 %v396
        %624 = vmatmul.mubr.f32.gmra.mrb[0].mxu0 %v395
        %v625 = vpop.f32.mrb[0].mxu0
        %v626 = vadd.f32 %v516, %v625
        %v627 = vpop.f32.mrb[0].mxu0
        %v628 = vadd.f32 %v520, %v627
        %629 = vmatprep.mubr.f32.mxu0 %v398
        %630 = vmatmul.mubr.f32.gmra.mrb[0].mxu0 %v397
        %v631 = vpop.f32.mrb[0].mxu0
        %v632 = vadd.f32 %v516, %v631
        %v633 = vpop.f32.mrb[0].mxu0
        %v634 = vadd.f32 %v520, %v633
        %635 = vmatprep.mubr.f32.mxu0 %v400
        %636 = vmatmul.mubr.f32.gmra.mrb[0].mxu0 %v399
        %v637 = vpop.f32.mrb[0].mxu0
        %v638 = vadd.f32 %v516, %v637
        %v639 = vpop.f32.mrb[0].mxu0
        %v640 = vadd.f32 %v520, %v639
        %641 = vmatprep.mubr.f32.mxu0 %v402
        %642 = vmatmul.mubr.f32.gmra.mrb[0].mxu0 %v401
        %v643 = vpop.f32.mrb[0].mxu0
        %v644 = vadd.f32 %v516, %v643
        %v645 = vpop.f32.mrb[0].mxu0
        %v646 = vadd.f32 %v520, %v645
        %647 = vmatprep.mubr.f32.mxu0 %v404
        %648 = vmatmul.mubr.f32.gmra.mrb[0].mxu0 %v403
        %v649 = vpop.f32.mrb[0].mxu0
        %v650 = vadd.f32 %v516, %v649
        %v651 = vpop.f32.mrb[0].mxu0
        %v652 = vadd.f32 %v520, %v651
        %653 = vmatprep.mubr.f32.mxu0 %v406
        %654 = vmatmul.mubr.f32.gmra.mrb[0].mxu0 %v405
        %v655 = vpop.f32.mrb[0].mxu0
        %v656 = vadd.f32 %v516, %v655
        %v657 = vpop.f32.mrb[0].mxu0
        %v658 = vadd.f32 %v520, %v657
        %659 = vmatprep.mubr.f32.mxu0 %v408
        %660 = vmatmul.mubr.f32.gmra.mrb[0].mxu0 %v407
        %v661 = vpop.f32.mrb[0].mxu0
        %v662 = vadd.f32 %v516, %v661
        %v663 = vpop.f32.mrb[0].mxu0
        %v664 = vadd.f32 %v520, %v663
        %665 = vmatprep.mubr.f32.mxu0 %v410
        %666 = vmatmul.mubr.f32.gmra.mrb[0].mxu0 %v409
        %v667 = vpop.f32.mrb[0].mxu0
        %v668 = vadd.f32 %v516, %v667
        %v669 = vpop.f32.mrb[0].mxu0
        %v670 = vadd.f32 %v520, %v669
        %671 = vmatprep.mubr.f32.mxu0 %v412
        %672 = vmatmul.mubr.f32.gmra.mrb[0].mxu0 %v411
        %v673 = vpop.f32.mrb[0].mxu0
        %v674 = vadd.f32 %v516, %v673
        %v675 = vpop.f32.mrb[0].mxu0
        %v676 = vadd.f32 %v520, %v675
        %677 = vmatprep.mubr.f32.mxu0 %v414
        %678 = vmatmul.mubr.f32.gmra.mrb[0].mxu0 %v413
        %v679 = vpop.f32.mrb[0].mxu0
        %v680 = vadd.f32 %v516, %v679
        %v681 = vpop.f32.mrb[0].mxu0
        %v682 = vadd.f32 %v520, %v681
        %683 = vmatprep.mubr.f32.mxu0 %v416
        %684 = vmatmul.mubr.f32.gmra.mrb[0].mxu0 %v415
        %v685 = vpop.f32.mrb[0].mxu0
        %v686 = vadd.f32 %v516, %v685
        %v687 = vpop.f32.mrb[0].mxu0
        %v688 = vadd.f32 %v520, %v687
        %689 = vmatprep.mubr.f32.mxu0 %v418
        %690 = vmatmul.mubr.f32.gmra.mrb[0].mxu0 %v417
        %v691 = vpop.f32.mrb[0].mxu0
        %v692 = vadd.f32 %v516, %v691
        %v693 = vpop.f32.mrb[0].mxu0
        %v694 = vadd.f32 %v520, %v693
        %695 = vmatprep.mubr.f32.mxu0 %v420
        %696 = vmatmul.mubr.f32.gmra.mrb[0].mxu0 %v419
        %v697 = vpop.f32.mrb[0].mxu0
        %v698 = vadd.f32 %v516, %v697
        %v699 = vpop.f32.mrb[0].mxu0
        %v700 = vadd.f32 %v520, %v699
        %701 = vmatprep.mubr.f32.mxu0 %v422
        %702 = vmatmul.mubr.f32.gmra.mrb[0].mxu0 %v421
        %v703 = vpop.f32.mrb[0].mxu0
        %v704 = vadd.f32 %v516, %v703
        %v705 = vpop.f32.mrb[0].mxu0
        %v706 = vadd.f32 %v520, %v705
        %707 = vmatprep.mubr.f32.mxu0 %v424
        %708 = vmatmul.mubr.f32.gmra.mrb[0].mxu0 %v423
        %v709 = vpop.f32.mrb[0].mxu0
        %v710 = vadd.f32 %v516, %v709
        %v711 = vpop.f32.mrb[0].mxu0
        %v712 = vadd.f32 %v520, %v711
        %713 = vmatprep.mubr.f32.mxu0 %v426
        %714 = vmatmul.mubr.f32.gmra.mrb[0].mxu0 %v425
        %v715 = vpop.f32.mrb[0].mxu0
        %v716 = vadd.f32 %v516, %v715
        %v717 = vpop.f32.mrb[0].mxu0
        %v718 = vadd.f32 %v520, %v717
        %719 = vmatprep.mubr.f32.mxu0 %v428
        %720 = vmatmul.mubr.f32.gmra.mrb[0].mxu0 %v427
        %v721 = vpop.f32.mrb[0].mxu0
        %v722 = vadd.f32 %v516, %v721
        %v723 = vpop.f32.mrb[0].mxu0
        %v724 = vadd.f32 %v520, %v723
        %725 = vmatprep.mubr.f32.mxu0 %v430
        %726 = vmatmul.mubr.f32.gmra.mrb[0].mxu0 %v429
        %v727 = vpop.f32.mrb[0].mxu0
        %v728 = vadd.f32 %v516, %v727
        %v729 = vpop.f32.mrb[0].mxu0
        %v730 = vadd.f32 %v520, %v729
        %731 = vmatprep.mubr.f32.mxu0 %v432
        %732 = vmatmul.mubr.f32.gmra.mrb[0].mxu0 %v431
        %v733 = vpop.f32.mrb[0].mxu0
        %v734 = vadd.f32 %v516, %v733
        %v735 = vpop.f32.mrb[0].mxu0
        %v736 = vadd.f32 %v520, %v735
        %737 = vmatprep.mubr.f32.mxu0 %v434
        %738 = vmatmul.mubr.f32.gmra.mrb[0].mxu0 %v433
        %v739 = vpop.f32.mrb[0].mxu0
        %v740 = vadd.f32 %v516, %v739
        %v741 = vpop.f32.mrb[0].mxu0
        %v742 = vadd.f32 %v520, %v741
        %743 = vmatprep.mubr.f32.mxu0 %v436
        %744 = vmatmul.mubr.f32.gmra.mrb[0].mxu0 %v435
        %v745 = vpop.f32.mrb[0].mxu0
        %v746 = vadd.f32 %v516, %v745
        %v747 = vpop.f32.mrb[0].mxu0
        %v748 = vadd.f32 %v520, %v747
        %749 = vmatprep.mubr.f32.mxu0 %v438
        %750 = vmatmul.mubr.f32.gmra.mrb[0].mxu0 %v437
        %v751 = vpop.f32.mrb[0].mxu0
        %v752 = vadd.f32 %v516, %v751
        %v753 = vpop.f32.mrb[0].mxu0
        %v754 = vadd.f32 %v520, %v753
        %755 = vmatprep.mubr.f32.mxu0 %v440
        %756 = vmatmul.mubr.f32.gmra.mrb[0].mxu0 %v439
        %v757 = vpop.f32.mrb[0].mxu0
        %v758 = vadd.f32 %v516, %v757
        %v759 = vpop.f32.mrb[0].mxu0
        %v760 = vadd.f32 %v520, %v759
        %761 = vmatprep.mubr.f32.mxu0 %v442
        %762 = vmatmul.mubr.f32.gmra.mrb[0].mxu0 %v441
        %v763 = vpop.f32.mrb[0].mxu0
        %v764 = vadd.f32 %v516, %v763
        %v765 = vpop.f32.mrb[0].mxu0
        %v766 = vadd.f32 %v520, %v765
        %767 = vmatprep.mubr.f32.mxu0 %v444
        %768 = vmatmul.mubr.f32.gmra.mrb[0].mxu0 %v443
        %v769 = vpop.f32.mrb[0].mxu0
        %v770 = vadd.f32 %v516, %v769
        %v771 = vpop.f32.mrb[0].mxu0
        %v772 = vadd.f32 %v520, %v771
        %773 = vmatprep.mubr.f32.mxu0 %v446
        %774 = vmatmul.mubr.f32.gmra.mrb[0].mxu0 %v445
        %v775 = vpop.f32.mrb[0].mxu0
        %v776 = vadd.f32 %v516, %v775
        %v777 = vpop.f32.mrb[0].mxu0
        %v778 = vadd.f32 %v520, %v777
        %779 = vdwg.mxu0
        %v780 = vmax.f32 %v590, 0.0
        %v781 = vmax.f32 %v592, 0.0
        %v782 = vmax.f32 %v596, 0.0
        %v783 = vmax.f32 %v598, 0.0
        %v784 = vmax.f32 %v602, 0.0
        %v785 = vmax.f32 %v604, 0.0
        %v786 = vmax.f32 %v608, 0.0
        %v787 = vmax.f32 %v610, 0.0
        %v788 = vmax.f32 %v614, 0.0
        %v789 = vmax.f32 %v616, 0.0
        %v790 = vmax.f32 %v620, 0.0
        %v791 = vmax.f32 %v622, 0.0
        %v792 = vmax.f32 %v626, 0.0
        %v793 = vmax.f32 %v628, 0.0
        %v794 = vmax.f32 %v632, 0.0
        %v795 = vmax.f32 %v634, 0.0
        %v796 = vmax.f32 %v638, 0.0
        %v797 = vmax.f32 %v640, 0.0
        %v798 = vmax.f32 %v644, 0.0
        %v799 = vmax.f32 %v646, 0.0
        %v800 = vmax.f32 %v650, 0.0
        %v801 = vmax.f32 %v652, 0.0
        %v802 = vmax.f32 %v656, 0.0
        %v803 = vmax.f32 %v658, 0.0
        %v804 = vmax.f32 %v662, 0.0
        %v805 = vmax.f32 %v664, 0.0
        %v806 = vmax.f32 %v668, 0.0
        %v807 = vmax.f32 %v670, 0.0
        %v808 = vmax.f32 %v674, 0.0
        %v809 = vmax.f32 %v676, 0.0
        %v810 = vmax.f32 %v680, 0.0
        %v811 = vmax.f32 %v682, 0.0
        %v812 = vmax.f32 %v686, 0.0
        %v813 = vmax.f32 %v688, 0.0
        %v814 = vmax.f32 %v692, 0.0
        %v815 = vmax.f32 %v694, 0.0
        %v816 = vmax.f32 %v698, 0.0
        %v817 = vmax.f32 %v700, 0.0
        %v818 = vmax.f32 %v704, 0.0
        %v819 = vmax.f32 %v706, 0.0
        %v820 = vmax.f32 %v710, 0.0
        %v821 = vmax.f32 %v712, 0.0
        %v822 = vmax.f32 %v716, 0.0
        %v823 = vmax.f32 %v718, 0.0
        %v824 = vmax.f32 %v722, 0.0
        %v825 = vmax.f32 %v724, 0.0
        %v826 = vmax.f32 %v728, 0.0
        %v827 = vmax.f32 %v730, 0.0
        %v828 = vmax.f32 %v734, 0.0
        %v829 = vmax.f32 %v736, 0.0
        %v830 = vmax.f32 %v740, 0.0
        %v831 = vmax.f32 %v742, 0.0
        %v832 = vmax.f32 %v746, 0.0
        %v833 = vmax.f32 %v748, 0.0
        %v834 = vmax.f32 %v752, 0.0
        %v835 = vmax.f32 %v754, 0.0
        %v836 = vmax.f32 %v758, 0.0
        %v837 = vmax.f32 %v760, 0.0
        %v838 = vmax.f32 %v764, 0.0
        %v839 = vmax.f32 %v766, 0.0
        %v840 = vmax.f32 %v770, 0.0
        %v841 = vmax.f32 %v772, 0.0
        %v842 = vmax.f32 %v776, 0.0
        %v843 = vmax.f32 %v778, 0.0
        %v844 = vld [vmem:[#allocation7] sm:$0xff]
        %v845 = vld [vmem:[#allocation7 + $0x8] sm:$0xff]
        %v846 = vld [vmem:[#allocation7 + $0x10] sm:$0xff]
        %v847 = vld [vmem:[#allocation7 + $0x18] sm:$0xff]
        %v848 = vld [vmem:[#allocation7 + $0x20] sm:$0xff]
        %v849 = vld [vmem:[#allocation7 + $0x28] sm:$0xff]
        %v850 = vld [vmem:[#allocation7 + $0x30] sm:$0xff]
        %v851 = vld [vmem:[#allocation7 + $0x38] sm:$0xff]
        %v852 = vld [vmem:[#allocation7 + $0x40] sm:$0xff]
        %v853 = vld [vmem:[#allocation7 + $0x48] sm:$0xff]
        %v854 = vld [vmem:[#allocation7 + $0x50] sm:$0xff]
        %v855 = vld [vmem:[#allocation7 + $0x58] sm:$0xff]
        %v856 = vld [vmem:[#allocation7 + $0x60] sm:$0xff]
        %v857 = vld [vmem:[#allocation7 + $0x68] sm:$0xff]
        %v858 = vld [vmem:[#allocation7 + $0x70] sm:$0xff]
        %v859 = vld [vmem:[#allocation7 + $0x78] sm:$0xff]
        %v860 = vld [vmem:[#allocation7 + $0x80] sm:$0xff]
        %v861 = vld [vmem:[#allocation7 + $0x88] sm:$0xff]
        %v862 = vld [vmem:[#allocation7 + $0x90] sm:$0xff]
        %v863 = vld [vmem:[#allocation7 + $0x98] sm:$0xff]
        %v864 = vld [vmem:[#allocation7 + $0xa0] sm:$0xff]
        %v865 = vld [vmem:[#allocation7 + $0xa8] sm:$0xff]
        %v866 = vld [vmem:[#allocation7 + $0xb0] sm:$0xff]
        %v867 = vld [vmem:[#allocation7 + $0xb8] sm:$0xff]
        %v868 = vld [vmem:[#allocation7 + $0xc0] sm:$0xff]
        %v869 = vld [vmem:[#allocation7 + $0xc8] sm:$0xff]
        %v870 = vld [vmem:[#allocation7 + $0xd0] sm:$0xff]
        %v871 = vld [vmem:[#allocation7 + $0xd8] sm:$0xff]
        %v872 = vld [vmem:[#allocation7 + $0xe0] sm:$0xff]
        %v873 = vld [vmem:[#allocation7 + $0xe8] sm:$0xff]
        %v874 = vld [vmem:[#allocation7 + $0xf0] sm:$0xff]
        %v875 = vld [vmem:[#allocation7 + $0xf8] sm:$0xff]
        %v876 = vld [vmem:[%s4] sm:$0x1]
        %v878 = vlaneseq
        %v879 = vshrl.u32 %v878, 7
        %v880 = vsub.s32 0, %v879
        %v881 = vrot.slane %v876, %v880
        %883 = vmatprep.subr.mxu0 0.0
        %884 = vmatpush1.msra.mxu0 %v844
        %885 = vmatprep.subr.mxu0 0.0
        %886 = vmatpush1.msra.mxu0 %v845
        %887 = vmatprep.subr.mxu0 0.0
        %888 = vmatpush1.msra.mxu0 %v846
        %889 = vmatprep.subr.mxu0 0.0
        %890 = vmatpush1.msra.mxu0 %v847
        %891 = vmatprep.subr.mxu0 0.0
        %892 = vmatpush1.msra.mxu0 %v848
        %893 = vmatprep.subr.mxu0 0.0
        %894 = vmatpush1.msra.mxu0 %v849
        %895 = vmatprep.subr.mxu0 0.0
        %896 = vmatpush1.msra.mxu0 %v850
        %897 = vmatprep.subr.mxu0 0.0
        %898 = vmatpush1.msra.mxu0 %v851
        %899 = vmatprep.subr.mxu0 0.0
        %900 = vmatpush1.msra.mxu0 %v852
        %901 = vmatprep.subr.mxu0 0.0
        %902 = vmatpush1.msra.mxu0 %v853
        %903 = vmatprep.subr.mxu0 0.0
        %904 = vmatpush1.msra.mxu0 %v854
        %905 = vmatprep.subr.mxu0 0.0
        %906 = vmatpush1.msra.mxu0 %v855
        %907 = vmatprep.subr.mxu0 0.0
        %908 = vmatpush1.msra.mxu0 %v856
        %909 = vmatprep.subr.mxu0 0.0
        %910 = vmatpush1.msra.mxu0 %v857
        %911 = vmatprep.subr.mxu0 0.0
        %912 = vmatpush1.msra.mxu0 %v858
        %913 = vmatprep.subr.mxu0 0.0
        %914 = vmatpush1.msra.mxu0 %v859
        %915 = vmatprep.subr.mxu0 0.0
        %916 = vmatpush1.msra.mxu0 %v860
        %917 = vmatprep.subr.mxu0 0.0
        %918 = vmatpush1.msra.mxu0 %v861
        %919 = vmatprep.subr.mxu0 0.0
        %920 = vmatpush1.msra.mxu0 %v862
        %921 = vmatprep.subr.mxu0 0.0
        %922 = vmatpush1.msra.mxu0 %v863
        %923 = vmatprep.subr.mxu0 0.0
        %924 = vmatpush1.msra.mxu0 %v864
        %925 = vmatprep.subr.mxu0 0.0
        %926 = vmatpush1.msra.mxu0 %v865
        %927 = vmatprep.subr.mxu0 0.0
        %928 = vmatpush1.msra.mxu0 %v866
        %929 = vmatprep.subr.mxu0 0.0
        %930 = vmatpush1.msra.mxu0 %v867
        %931 = vmatprep.subr.mxu0 0.0
        %932 = vmatpush1.msra.mxu0 %v868
        %933 = vmatprep.subr.mxu0 0.0
        %934 = vmatpush1.msra.mxu0 %v869
        %935 = vmatprep.subr.mxu0 0.0
        %936 = vmatpush1.msra.mxu0 %v870
        %937 = vmatprep.subr.mxu0 0.0
        %938 = vmatpush1.msra.mxu0 %v871
        %939 = vmatprep.subr.mxu0 0.0
        %940 = vmatpush1.msra.mxu0 %v872
        %941 = vmatprep.subr.mxu0 0.0
        %942 = vmatpush1.msra.mxu0 %v873
        %943 = vmatprep.subr.mxu0 0.0
        %944 = vmatpush1.msra.mxu0 %v874
        %945 = vmatprep.subr.mxu0 0.0
        %946 = vmatpush1.msra.mxu0 %v875
        %947 = vmatprep.mubr.f32.mxu0 %v781
        %948 = vmatmul.mubr.f32.gmra.mrb[0].mxu0 %v780
        %v949 = vpop.f32.mrb[0].mxu0
        %v950 = vadd.f32 %v881, %v949
        %v951 = vpop.f32.mrb[0].mxu0
        %952 = vmatprep.mubr.f32.mxu0 %v783
        %953 = vmatmul.mubr.f32.gmra.mrb[0].mxu0 %v782
        %v954 = vpop.f32.mrb[0].mxu0
        %v955 = vadd.f32 %v881, %v954
        %v956 = vpop.f32.mrb[0].mxu0
        %957 = vmatprep.mubr.f32.mxu0 %v785
        %958 = vmatmul.mubr.f32.gmra.mrb[0].mxu0 %v784
        %v959 = vpop.f32.mrb[0].mxu0
        %v960 = vadd.f32 %v881, %v959
        %v961 = vpop.f32.mrb[0].mxu0
        %962 = vmatprep.mubr.f32.mxu0 %v787
        %963 = vmatmul.mubr.f32.gmra.mrb[0].mxu0 %v786
        %v964 = vpop.f32.mrb[0].mxu0
        %v965 = vadd.f32 %v881, %v964
        %v966 = vpop.f32.mrb[0].mxu0
        %967 = vmatprep.mubr.f32.mxu0 %v789
        %968 = vmatmul.mubr.f32.gmra.mrb[0].mxu0 %v788
        %v969 = vpop.f32.mrb[0].mxu0
        %v970 = vadd.f32 %v881, %v969
        %v971 = vpop.f32.mrb[0].mxu0
        %972 = vmatprep.mubr.f32.mxu0 %v791
        %973 = vmatmul.mubr.f32.gmra.mrb[0].mxu0 %v790
        %v974 = vpop.f32.mrb[0].mxu0
        %v975 = vadd.f32 %v881, %v974
        %v976 = vpop.f32.mrb[0].mxu0
        %977 = vmatprep.mubr.f32.mxu0 %v793
        %978 = vmatmul.mubr.f32.gmra.mrb[0].mxu0 %v792
        %v979 = vpop.f32.mrb[0].mxu0
        %v980 = vadd.f32 %v881, %v979
        %v981 = vpop.f32.mrb[0].mxu0
        %982 = vmatprep.mubr.f32.mxu0 %v795
        %983 = vmatmul.mubr.f32.gmra.mrb[0].mxu0 %v794
        %v984 = vpop.f32.mrb[0].mxu0
        %v985 = vadd.f32 %v881, %v984
        %v986 = vpop.f32.mrb[0].mxu0
        %987 = vmatprep.mubr.f32.mxu0 %v797
        %988 = vmatmul.mubr.f32.gmra.mrb[0].mxu0 %v796
        %v989 = vpop.f32.mrb[0].mxu0
        %v990 = vadd.f32 %v881, %v989
        %v991 = vpop.f32.mrb[0].mxu0
        %992 = vmatprep.mubr.f32.mxu0 %v799
        %993 = vmatmul.mubr.f32.gmra.mrb[0].mxu0 %v798
        %v994 = vpop.f32.mrb[0].mxu0
        %v995 = vadd.f32 %v881, %v994
        %v996 = vpop.f32.mrb[0].mxu0
        %997 = vmatprep.mubr.f32.mxu0 %v801
        %998 = vmatmul.mubr.f32.gmra.mrb[0].mxu0 %v800
        %v999 = vpop.f32.mrb[0].mxu0
        %v1000 = vadd.f32 %v881, %v999
        %v1001 = vpop.f32.mrb[0].mxu0
        %1002 = vmatprep.mubr.f32.mxu0 %v803
        %1003 = vmatmul.mubr.f32.gmra.mrb[0].mxu0 %v802
        %v1004 = vpop.f32.mrb[0].mxu0
        %v1005 = vadd.f32 %v881, %v1004
        %v1006 = vpop.f32.mrb[0].mxu0
        %1007 = vmatprep.mubr.f32.mxu0 %v805
        %1008 = vmatmul.mubr.f32.gmra.mrb[0].mxu0 %v804
        %v1009 = vpop.f32.mrb[0].mxu0
        %v1010 = vadd.f32 %v881, %v1009
        %v1011 = vpop.f32.mrb[0].mxu0
        %1012 = vmatprep.mubr.f32.mxu0 %v807
        %1013 = vmatmul.mubr.f32.gmra.mrb[0].mxu0 %v806
        %v1014 = vpop.f32.mrb[0].mxu0
        %v1015 = vadd.f32 %v881, %v1014
        %v1016 = vpop.f32.mrb[0].mxu0
        %1017 = vmatprep.mubr.f32.mxu0 %v809
        %1018 = vmatmul.mubr.f32.gmra.mrb[0].mxu0 %v808
        %v1019 = vpop.f32.mrb[0].mxu0
        %v1020 = vadd.f32 %v881, %v1019
        %v1021 = vpop.f32.mrb[0].mxu0
        %1022 = vmatprep.mubr.f32.mxu0 %v811
        %1023 = vmatmul.mubr.f32.gmra.mrb[0].mxu0 %v810
        %v1024 = vpop.f32.mrb[0].mxu0
        %v1025 = vadd.f32 %v881, %v1024
        %v1026 = vpop.f32.mrb[0].mxu0
        %1027 = vmatprep.mubr.f32.mxu0 %v813
        %1028 = vmatmul.mubr.f32.gmra.mrb[0].mxu0 %v812
        %v1029 = vpop.f32.mrb[0].mxu0
        %v1030 = vadd.f32 %v881, %v1029
        %v1031 = vpop.f32.mrb[0].mxu0
        %1032 = vmatprep.mubr.f32.mxu0 %v815
        %1033 = vmatmul.mubr.f32.gmra.mrb[0].mxu0 %v814
        %v1034 = vpop.f32.mrb[0].mxu0
        %v1035 = vadd.f32 %v881, %v1034
        %v1036 = vpop.f32.mrb[0].mxu0
        %1037 = vmatprep.mubr.f32.mxu0 %v817
        %1038 = vmatmul.mubr.f32.gmra.mrb[0].mxu0 %v816
        %v1039 = vpop.f32.mrb[0].mxu0
        %v1040 = vadd.f32 %v881, %v1039
        %v1041 = vpop.f32.mrb[0].mxu0
        %1042 = vmatprep.mubr.f32.mxu0 %v819
        %1043 = vmatmul.mubr.f32.gmra.mrb[0].mxu0 %v818
        %v1044 = vpop.f32.mrb[0].mxu0
        %v1045 = vadd.f32 %v881, %v1044
        %v1046 = vpop.f32.mrb[0].mxu0
        %1047 = vmatprep.mubr.f32.mxu0 %v821
        %1048 = vmatmul.mubr.f32.gmra.mrb[0].mxu0 %v820
        %v1049 = vpop.f32.mrb[0].mxu0
        %v1050 = vadd.f32 %v881, %v1049
        %v1051 = vpop.f32.mrb[0].mxu0
        %1052 = vmatprep.mubr.f32.mxu0 %v823
        %1053 = vmatmul.mubr.f32.gmra.mrb[0].mxu0 %v822
        %v1054 = vpop.f32.mrb[0].mxu0
        %v1055 = vadd.f32 %v881, %v1054
        %v1056 = vpop.f32.mrb[0].mxu0
        %1057 = vmatprep.mubr.f32.mxu0 %v825
        %1058 = vmatmul.mubr.f32.gmra.mrb[0].mxu0 %v824
        %v1059 = vpop.f32.mrb[0].mxu0
        %v1060 = vadd.f32 %v881, %v1059
        %v1061 = vpop.f32.mrb[0].mxu0
        %1062 = vmatprep.mubr.f32.mxu0 %v827
        %1063 = vmatmul.mubr.f32.gmra.mrb[0].mxu0 %v826
        %v1064 = vpop.f32.mrb[0].mxu0
        %v1065 = vadd.f32 %v881, %v1064
        %v1066 = vpop.f32.mrb[0].mxu0
        %1067 = vmatprep.mubr.f32.mxu0 %v829
        %1068 = vmatmul.mubr.f32.gmra.mrb[0].mxu0 %v828
        %v1069 = vpop.f32.mrb[0].mxu0
        %v1070 = vadd.f32 %v881, %v1069
        %v1071 = vpop.f32.mrb[0].mxu0
        %1072 = vmatprep.mubr.f32.mxu0 %v831
        %1073 = vmatmul.mubr.f32.gmra.mrb[0].mxu0 %v830
        %v1074 = vpop.f32.mrb[0].mxu0
        %v1075 = vadd.f32 %v881, %v1074
        %v1076 = vpop.f32.mrb[0].mxu0
        %1077 = vmatprep.mubr.f32.mxu0 %v833
        %1078 = vmatmul.mubr.f32.gmra.mrb[0].mxu0 %v832
        %v1079 = vpop.f32.mrb[0].mxu0
        %v1080 = vadd.f32 %v881, %v1079
        %v1081 = vpop.f32.mrb[0].mxu0
        %1082 = vmatprep.mubr.f32.mxu0 %v835
        %1083 = vmatmul.mubr.f32.gmra.mrb[0].mxu0 %v834
        %v1084 = vpop.f32.mrb[0].mxu0
        %v1085 = vadd.f32 %v881, %v1084
        %v1086 = vpop.f32.mrb[0].mxu0
        %1087 = vmatprep.mubr.f32.mxu0 %v837
        %1088 = vmatmul.mubr.f32.gmra.mrb[0].mxu0 %v836
        %v1089 = vpop.f32.mrb[0].mxu0
        %v1090 = vadd.f32 %v881, %v1089
        %v1091 = vpop.f32.mrb[0].mxu0
        %1092 = vmatprep.mubr.f32.mxu0 %v839
        %1093 = vmatmul.mubr.f32.gmra.mrb[0].mxu0 %v838
        %v1094 = vpop.f32.mrb[0].mxu0
        %v1095 = vadd.f32 %v881, %v1094
        %v1096 = vpop.f32.mrb[0].mxu0
        %1097 = vmatprep.mubr.f32.mxu0 %v841
        %1098 = vmatmul.mubr.f32.gmra.mrb[0].mxu0 %v840
        %v1099 = vpop.f32.mrb[0].mxu0
        %v1100 = vadd.f32 %v881, %v1099
        %v1101 = vpop.f32.mrb[0].mxu0
        %1102 = vmatprep.mubr.f32.mxu0 %v843
        %1103 = vmatmul.mubr.f32.gmra.mrb[0].mxu0 %v842
        %v1104 = vpop.f32.mrb[0].mxu0
        %v1105 = vadd.f32 %v881, %v1104
        %v1106 = vpop.f32.mrb[0].mxu0
        %1107 = vdwg.mxu0
        %v1108 = vmax.f32 %v950, 0.0
        %v1109 = vmax.f32 %v955, 0.0
        %v1110 = vmax.f32 %v960, 0.0
        %v1111 = vmax.f32 %v965, 0.0
        %v1112 = vmax.f32 %v970, 0.0
        %v1113 = vmax.f32 %v975, 0.0
        %v1114 = vmax.f32 %v980, 0.0
        %v1115 = vmax.f32 %v985, 0.0
        %v1116 = vmax.f32 %v990, 0.0
        %v1117 = vmax.f32 %v995, 0.0
        %v1118 = vmax.f32 %v1000, 0.0
        %v1119 = vmax.f32 %v1005, 0.0
        %v1120 = vmax.f32 %v1010, 0.0
        %v1121 = vmax.f32 %v1015, 0.0
        %v1122 = vmax.f32 %v1020, 0.0
        %v1123 = vmax.f32 %v1025, 0.0
        %v1124 = vmax.f32 %v1030, 0.0
        %v1125 = vmax.f32 %v1035, 0.0
        %v1126 = vmax.f32 %v1040, 0.0
        %v1127 = vmax.f32 %v1045, 0.0
        %v1128 = vmax.f32 %v1050, 0.0
        %v1129 = vmax.f32 %v1055, 0.0
        %v1130 = vmax.f32 %v1060, 0.0
        %v1131 = vmax.f32 %v1065, 0.0
        %v1132 = vmax.f32 %v1070, 0.0
        %v1133 = vmax.f32 %v1075, 0.0
        %v1134 = vmax.f32 %v1080, 0.0
        %v1135 = vmax.f32 %v1085, 0.0
        %v1136 = vmax.f32 %v1090, 0.0
        %v1137 = vmax.f32 %v1095, 0.0
        %v1138 = vmax.f32 %v1100, 0.0
        %v1139 = vmax.f32 %v1105, 0.0
        %v1140 = vld [vmem:[%s5] sm:$0xff]
        %v1141 = vld [vmem:[%s5 + $0x8] sm:$0xff]
        %v1142 = vld [vmem:[%s5 + $0x10] sm:$0xff]
        %v1143 = vld [vmem:[%s5 + $0x18] sm:$0xff]
        %v1144 = vld [vmem:[%s5 + $0x20] sm:$0xff]
        %v1145 = vld [vmem:[%s5 + $0x28] sm:$0xff]
        %v1146 = vld [vmem:[%s5 + $0x30] sm:$0xff]
        %v1147 = vld [vmem:[%s5 + $0x38] sm:$0xff]
        %v1148 = vld [vmem:[%s5 + $0x40] sm:$0xff]
        %v1149 = vld [vmem:[%s5 + $0x48] sm:$0xff]
        %v1150 = vld [vmem:[%s5 + $0x50] sm:$0xff]
        %v1151 = vld [vmem:[%s5 + $0x58] sm:$0xff]
        %v1152 = vld [vmem:[%s5 + $0x60] sm:$0xff]
        %v1153 = vld [vmem:[%s5 + $0x68] sm:$0xff]
        %v1154 = vld [vmem:[%s5 + $0x70] sm:$0xff]
        %v1155 = vld [vmem:[%s5 + $0x78] sm:$0xff]
        %v1156 = vld [vmem:[%s6] sm:$0x1]
        %v1158 = vlaneseq
        %v1159 = vshrl.u32 %v1158, 7
        %v1160 = vsub.s32 0, %v1159
        %v1161 = vrot.slane %v1156, %v1160
        %1163 = vmatprep.subr.mxu0 0.0
        %1164 = vmatpush1.msra.mxu0 %v1140
        %1165 = vmatprep.subr.mxu0 0.0
        %1166 = vmatpush1.msra.mxu0 %v1141
        %1167 = vmatprep.subr.mxu0 0.0
        %1168 = vmatpush1.msra.mxu0 %v1142
        %1169 = vmatprep.subr.mxu0 0.0
        %1170 = vmatpush1.msra.mxu0 %v1143
        %1171 = vmatprep.subr.mxu0 0.0
        %1172 = vmatpush1.msra.mxu0 %v1144
        %1173 = vmatprep.subr.mxu0 0.0
        %1174 = vmatpush1.msra.mxu0 %v1145
        %1175 = vmatprep.subr.mxu0 0.0
        %1176 = vmatpush1.msra.mxu0 %v1146
        %1177 = vmatprep.subr.mxu0 0.0
        %1178 = vmatpush1.msra.mxu0 %v1147
        %1179 = vmatprep.subr.mxu0 0.0
        %1180 = vmatpush1.msra.mxu0 %v1148
        %1181 = vmatprep.subr.mxu0 0.0
        %1182 = vmatpush1.msra.mxu0 %v1149
        %1183 = vmatprep.subr.mxu0 0.0
        %1184 = vmatpush1.msra.mxu0 %v1150
        %1185 = vmatprep.subr.mxu0 0.0
        %1186 = vmatpush1.msra.mxu0 %v1151
        %1187 = vmatprep.subr.mxu0 0.0
        %1188 = vmatpush1.msra.mxu0 %v1152
        %1189 = vmatprep.subr.mxu0 0.0
        %1190 = vmatpush1.msra.mxu0 %v1153
        %1191 = vmatprep.subr.mxu0 0.0
        %1192 = vmatpush1.msra.mxu0 %v1154
        %1193 = vmatprep.subr.mxu0 0.0
        %1194 = vmatpush1.msra.mxu0 %v1155
        %1195 = vmatprep.subr.mxu0 0.0
        %1196 = vmatpush1.msra.mxu0 0.0
        %1197 = vmatprep.subr.mxu0 0.0
        %1198 = vmatpush1.msra.mxu0 0.0
        %1199 = vmatprep.subr.mxu0 0.0
        %1200 = vmatpush1.msra.mxu0 0.0
        %1201 = vmatprep.subr.mxu0 0.0
        %1202 = vmatpush1.msra.mxu0 0.0
        %1203 = vmatprep.subr.mxu0 0.0
        %1204 = vmatpush1.msra.mxu0 0.0
        %1205 = vmatprep.subr.mxu0 0.0
        %1206 = vmatpush1.msra.mxu0 0.0
        %1207 = vmatprep.subr.mxu0 0.0
        %1208 = vmatpush1.msra.mxu0 0.0
        %1209 = vmatprep.subr.mxu0 0.0
        %1210 = vmatpush1.msra.mxu0 0.0
        %1211 = vmatprep.subr.mxu0 0.0
        %1212 = vmatpush1.msra.mxu0 0.0
        %1213 = vmatprep.subr.mxu0 0.0
        %1214 = vmatpush1.msra.mxu0 0.0
        %1215 = vmatprep.subr.mxu0 0.0
        %1216 = vmatpush1.msra.mxu0 0.0
        %1217 = vmatprep.subr.mxu0 0.0
        %1218 = vmatpush1.msra.mxu0 0.0
        %1219 = vmatprep.subr.mxu0 0.0
        %1220 = vmatpush1.msra.mxu0 0.0
        %1221 = vmatprep.subr.mxu0 0.0
        %1222 = vmatpush1.msra.mxu0 0.0
        %1223 = vmatprep.subr.mxu0 0.0
        %1224 = vmatpush1.msra.mxu0 0.0
        %1225 = vmatprep.subr.mxu0 0.0
        %1226 = vmatpush1.msra.mxu0 0.0
        %1227 = vmatprep.mubr.f32.mxu0 0.0
        %1228 = vmatmul.mubr.f32.gmra.mrb[0].mxu0 %v1108
        %v1229 = vpop.f32.mrb[0].mxu0
        %v1230 = vadd.f32 %v1161, %v1229
        %v1231 = vpop.f32.mrb[0].mxu0
        %1232 = vmatprep.mubr.f32.mxu0 0.0
        %1233 = vmatmul.mubr.f32.gmra.mrb[0].mxu0 %v1109
        %v1234 = vpop.f32.mrb[0].mxu0
        %v1235 = vadd.f32 %v1161, %v1234
        %v1236 = vpop.f32.mrb[0].mxu0
        %1237 = vmatprep.mubr.f32.mxu0 0.0
        %1238 = vmatmul.mubr.f32.gmra.mrb[0].mxu0 %v1110
        %v1239 = vpop.f32.mrb[0].mxu0
        %v1240 = vadd.f32 %v1161, %v1239
        %v1241 = vpop.f32.mrb[0].mxu0
        %1242 = vmatprep.mubr.f32.mxu0 0.0
        %1243 = vmatmul.mubr.f32.gmra.mrb[0].mxu0 %v1111
        %v1244 = vpop.f32.mrb[0].mxu0
        %v1245 = vadd.f32 %v1161, %v1244
        %v1246 = vpop.f32.mrb[0].mxu0
        %1247 = vmatprep.mubr.f32.mxu0 0.0
        %1248 = vmatmul.mubr.f32.gmra.mrb[0].mxu0 %v1112
        %v1249 = vpop.f32.mrb[0].mxu0
        %v1250 = vadd.f32 %v1161, %v1249
        %v1251 = vpop.f32.mrb[0].mxu0
        %1252 = vmatprep.mubr.f32.mxu0 0.0
        %1253 = vmatmul.mubr.f32.gmra.mrb[0].mxu0 %v1113
        %v1254 = vpop.f32.mrb[0].mxu0
        %v1255 = vadd.f32 %v1161, %v1254
        %v1256 = vpop.f32.mrb[0].mxu0
        %1257 = vmatprep.mubr.f32.mxu0 0.0
        %1258 = vmatmul.mubr.f32.gmra.mrb[0].mxu0 %v1114
        %v1259 = vpop.f32.mrb[0].mxu0
        %v1260 = vadd.f32 %v1161, %v1259
        %v1261 = vpop.f32.mrb[0].mxu0
        %1262 = vmatprep.mubr.f32.mxu0 0.0
        %1263 = vmatmul.mubr.f32.gmra.mrb[0].mxu0 %v1115
        %v1264 = vpop.f32.mrb[0].mxu0
        %v1265 = vadd.f32 %v1161, %v1264
        %v1266 = vpop.f32.mrb[0].mxu0
        %1267 = vmatprep.mubr.f32.mxu0 0.0
        %1268 = vmatmul.mubr.f32.gmra.mrb[0].mxu0 %v1116
        %v1269 = vpop.f32.mrb[0].mxu0
        %v1270 = vadd.f32 %v1161, %v1269
        %v1271 = vpop.f32.mrb[0].mxu0
        %1272 = vmatprep.mubr.f32.mxu0 0.0
        %1273 = vmatmul.mubr.f32.gmra.mrb[0].mxu0 %v1117
        %v1274 = vpop.f32.mrb[0].mxu0
        %v1275 = vadd.f32 %v1161, %v1274
        %v1276 = vpop.f32.mrb[0].mxu0
        %1277 = vmatprep.mubr.f32.mxu0 0.0
        %1278 = vmatmul.mubr.f32.gmra.mrb[0].mxu0 %v1118
        %v1279 = vpop.f32.mrb[0].mxu0
        %v1280 = vadd.f32 %v1161, %v1279
        %v1281 = vpop.f32.mrb[0].mxu0
        %1282 = vmatprep.mubr.f32.mxu0 0.0
        %1283 = vmatmul.mubr.f32.gmra.mrb[0].mxu0 %v1119
        %v1284 = vpop.f32.mrb[0].mxu0
        %v1285 = vadd.f32 %v1161, %v1284
        %v1286 = vpop.f32.mrb[0].mxu0
        %1287 = vmatprep.mubr.f32.mxu0 0.0
        %1288 = vmatmul.mubr.f32.gmra.mrb[0].mxu0 %v1120
        %v1289 = vpop.f32.mrb[0].mxu0
        %v1290 = vadd.f32 %v1161, %v1289
        %v1291 = vpop.f32.mrb[0].mxu0
        %1292 = vmatprep.mubr.f32.mxu0 0.0
        %1293 = vmatmul.mubr.f32.gmra.mrb[0].mxu0 %v1121
        %v1294 = vpop.f32.mrb[0].mxu0
        %v1295 = vadd.f32 %v1161, %v1294
        %v1296 = vpop.f32.mrb[0].mxu0
        %1297 = vmatprep.mubr.f32.mxu0 0.0
        %1298 = vmatmul.mubr.f32.gmra.mrb[0].mxu0 %v1122
        %v1299 = vpop.f32.mrb[0].mxu0
        %v1300 = vadd.f32 %v1161, %v1299
        %v1301 = vpop.f32.mrb[0].mxu0
        %1302 = vmatprep.mubr.f32.mxu0 0.0
        %1303 = vmatmul.mubr.f32.gmra.mrb[0].mxu0 %v1123
        %v1304 = vpop.f32.mrb[0].mxu0
        %v1305 = vadd.f32 %v1161, %v1304
        %v1306 = vpop.f32.mrb[0].mxu0
        %1307 = vmatprep.mubr.f32.mxu0 0.0
        %1308 = vmatmul.mubr.f32.gmra.mrb[0].mxu0 %v1124
        %v1309 = vpop.f32.mrb[0].mxu0
        %v1310 = vadd.f32 %v1161, %v1309
        %v1311 = vpop.f32.mrb[0].mxu0
        %1312 = vmatprep.mubr.f32.mxu0 0.0
        %1313 = vmatmul.mubr.f32.gmra.mrb[0].mxu0 %v1125
        %v1314 = vpop.f32.mrb[0].mxu0
        %v1315 = vadd.f32 %v1161, %v1314
        %v1316 = vpop.f32.mrb[0].mxu0
        %1317 = vmatprep.mubr.f32.mxu0 0.0
        %1318 = vmatmul.mubr.f32.gmra.mrb[0].mxu0 %v1126
        %v1319 = vpop.f32.mrb[0].mxu0
        %v1320 = vadd.f32 %v1161, %v1319
        %v1321 = vpop.f32.mrb[0].mxu0
        %1322 = vmatprep.mubr.f32.mxu0 0.0
        %1323 = vmatmul.mubr.f32.gmra.mrb[0].mxu0 %v1127
        %v1324 = vpop.f32.mrb[0].mxu0
        %v1325 = vadd.f32 %v1161, %v1324
        %v1326 = vpop.f32.mrb[0].mxu0
        %1327 = vmatprep.mubr.f32.mxu0 0.0
        %1328 = vmatmul.mubr.f32.gmra.mrb[0].mxu0 %v1128
        %v1329 = vpop.f32.mrb[0].mxu0
        %v1330 = vadd.f32 %v1161, %v1329
        %v1331 = vpop.f32.mrb[0].mxu0
        %1332 = vmatprep.mubr.f32.mxu0 0.0
        %1333 = vmatmul.mubr.f32.gmra.mrb[0].mxu0 %v1129
        %v1334 = vpop.f32.mrb[0].mxu0
        %v1335 = vadd.f32 %v1161, %v1334
        %v1336 = vpop.f32.mrb[0].mxu0
        %1337 = vmatprep.mubr.f32.mxu0 0.0
        %1338 = vmatmul.mubr.f32.gmra.mrb[0].mxu0 %v1130
        %v1339 = vpop.f32.mrb[0].mxu0
        %v1340 = vadd.f32 %v1161, %v1339
        %v1341 = vpop.f32.mrb[0].mxu0
        %1342 = vmatprep.mubr.f32.mxu0 0.0
        %1343 = vmatmul.mubr.f32.gmra.mrb[0].mxu0 %v1131
        %v1344 = vpop.f32.mrb[0].mxu0
        %v1345 = vadd.f32 %v1161, %v1344
        %v1346 = vpop.f32.mrb[0].mxu0
        %1347 = vmatprep.mubr.f32.mxu0 0.0
        %1348 = vmatmul.mubr.f32.gmra.mrb[0].mxu0 %v1132
        %v1349 = vpop.f32.mrb[0].mxu0
        %v1350 = vadd.f32 %v1161, %v1349
        %v1351 = vpop.f32.mrb[0].mxu0
        %1352 = vmatprep.mubr.f32.mxu0 0.0
        %1353 = vmatmul.mubr.f32.gmra.mrb[0].mxu0 %v1133
        %v1354 = vpop.f32.mrb[0].mxu0
        %v1355 = vadd.f32 %v1161, %v1354
        %v1356 = vpop.f32.mrb[0].mxu0
        %1357 = vmatprep.mubr.f32.mxu0 0.0
        %1358 = vmatmul.mubr.f32.gmra.mrb[0].mxu0 %v1134
        %v1359 = vpop.f32.mrb[0].mxu0
        %v1360 = vadd.f32 %v1161, %v1359
        %v1361 = vpop.f32.mrb[0].mxu0
        %1362 = vmatprep.mubr.f32.mxu0 0.0
        %1363 = vmatmul.mubr.f32.gmra.mrb[0].mxu0 %v1135
        %v1364 = vpop.f32.mrb[0].mxu0
        %v1365 = vadd.f32 %v1161, %v1364
        %v1366 = vpop.f32.mrb[0].mxu0
        %1367 = vmatprep.mubr.f32.mxu0 0.0
        %1368 = vmatmul.mubr.f32.gmra.mrb[0].mxu0 %v1136
        %v1369 = vpop.f32.mrb[0].mxu0
        %v1370 = vadd.f32 %v1161, %v1369
        %v1371 = vpop.f32.mrb[0].mxu0
        %1372 = vmatprep.mubr.f32.mxu0 0.0
        %1373 = vmatmul.mubr.f32.gmra.mrb[0].mxu0 %v1137
        %v1374 = vpop.f32.mrb[0].mxu0
        %v1375 = vadd.f32 %v1161, %v1374
        %v1376 = vpop.f32.mrb[0].mxu0
        %1377 = vmatprep.mubr.f32.mxu0 0.0
        %1378 = vmatmul.mubr.f32.gmra.mrb[0].mxu0 %v1138
        %v1379 = vpop.f32.mrb[0].mxu0
        %v1380 = vadd.f32 %v1161, %v1379
        %v1381 = vpop.f32.mrb[0].mxu0
        %1382 = vmatprep.mubr.f32.mxu0 0.0
        %1383 = vmatmul.mubr.f32.gmra.mrb[0].mxu0 %v1139
        %v1384 = vpop.f32.mrb[0].mxu0
        %v1385 = vadd.f32 %v1161, %v1384
        %v1386 = vpop.f32.mrb[0].mxu0
        %1387 = vdwg.mxu0
        %v1388 = vmax.f32 %v1230, 0.0
        %v1389 = vmax.f32 %v1235, 0.0
        %v1390 = vmax.f32 %v1240, 0.0
        %v1391 = vmax.f32 %v1245, 0.0
        %v1392 = vmax.f32 %v1250, 0.0
        %v1393 = vmax.f32 %v1255, 0.0
        %v1394 = vmax.f32 %v1260, 0.0
        %v1395 = vmax.f32 %v1265, 0.0
        %v1396 = vmax.f32 %v1270, 0.0
        %v1397 = vmax.f32 %v1275, 0.0
        %v1398 = vmax.f32 %v1280, 0.0
        %v1399 = vmax.f32 %v1285, 0.0
        %v1400 = vmax.f32 %v1290, 0.0
        %v1401 = vmax.f32 %v1295, 0.0
        %v1402 = vmax.f32 %v1300, 0.0
        %v1403 = vmax.f32 %v1305, 0.0
        %v1404 = vmax.f32 %v1310, 0.0
        %v1405 = vmax.f32 %v1315, 0.0
        %v1406 = vmax.f32 %v1320, 0.0
        %v1407 = vmax.f32 %v1325, 0.0
        %v1408 = vmax.f32 %v1330, 0.0
        %v1409 = vmax.f32 %v1335, 0.0
        %v1410 = vmax.f32 %v1340, 0.0
        %v1411 = vmax.f32 %v1345, 0.0
        %v1412 = vmax.f32 %v1350, 0.0
        %v1413 = vmax.f32 %v1355, 0.0
        %v1414 = vmax.f32 %v1360, 0.0
        %v1415 = vmax.f32 %v1365, 0.0
        %v1416 = vmax.f32 %v1370, 0.0
        %v1417 = vmax.f32 %v1375, 0.0
        %v1418 = vmax.f32 %v1380, 0.0
        %v1419 = vmax.f32 %v1385, 0.0
        %v1420 = vld [vmem:[%s7] sm:$0xff]
        %v1421 = vld [vmem:[%s7 + $0x8] sm:$0xff]
        %v1422 = vld [vmem:[%s7 + $0x10] sm:$0xff]
        %v1423 = vld [vmem:[%s7 + $0x18] sm:$0xff]
        %v1424 = vld [vmem:[%s7 + $0x20] sm:$0xff]
        %v1425 = vld [vmem:[%s7 + $0x28] sm:$0xff]
        %v1426 = vld [vmem:[%s7 + $0x30] sm:$0xff]
        %v1427 = vld [vmem:[%s7 + $0x38] sm:$0xff]
        %v1428 = vld [vmem:[%s8] sm:$0x1]
        %v1430 = vlaneseq
        %v1431 = vshrl.u32 %v1430, 7
        %v1432 = vsub.s32 0, %v1431
        %v1433 = vrot.slane %v1428, %v1432
        %vm1435 = vcmask 523264
        %v1437 = vsel %vm1435, %v1388, 0
        %v1440 = vsel %vm1435, %v1389, 0
        %v1443 = vsel %vm1435, %v1390, 0
        %v1446 = vsel %vm1435, %v1391, 0
        %v1449 = vsel %vm1435, %v1392, 0
        %v1452 = vsel %vm1435, %v1393, 0
        %v1455 = vsel %vm1435, %v1394, 0
        %v1458 = vsel %vm1435, %v1395, 0
        %v1461 = vsel %vm1435, %v1396, 0
        %v1464 = vsel %vm1435, %v1397, 0
        %v1467 = vsel %vm1435, %v1398, 0
        %v1470 = vsel %vm1435, %v1399, 0
        %v1473 = vsel %vm1435, %v1400, 0
        %v1476 = vsel %vm1435, %v1401, 0
        %v1479 = vsel %vm1435, %v1402, 0
        %v1482 = vsel %vm1435, %v1403, 0
        %v1485 = vsel %vm1435, %v1404, 0
        %v1488 = vsel %vm1435, %v1405, 0
        %v1491 = vsel %vm1435, %v1406, 0
        %v1494 = vsel %vm1435, %v1407, 0
        %v1497 = vsel %vm1435, %v1408, 0
        %v1500 = vsel %vm1435, %v1409, 0
        %v1503 = vsel %vm1435, %v1410, 0
        %v1506 = vsel %vm1435, %v1411, 0
        %v1509 = vsel %vm1435, %v1412, 0
        %v1512 = vsel %vm1435, %v1413, 0
        %v1515 = vsel %vm1435, %v1414, 0
        %v1518 = vsel %vm1435, %v1415, 0
        %v1521 = vsel %vm1435, %v1416, 0
        %v1524 = vsel %vm1435, %v1417, 0
        %v1527 = vsel %vm1435, %v1418, 0
        %v1530 = vsel %vm1435, %v1419, 0
        %1532 = vmatprep.subr.mxu0 0.0
        %1533 = vmatpush1.msra.mxu0 %v1420
        %1534 = vmatprep.subr.mxu0 0.0
        %1535 = vmatpush1.msra.mxu0 %v1421
        %1536 = vmatprep.subr.mxu0 0.0
        %1537 = vmatpush1.msra.mxu0 %v1422
        %1538 = vmatprep.subr.mxu0 0.0
        %1539 = vmatpush1.msra.mxu0 %v1423
        %1540 = vmatprep.subr.mxu0 0.0
        %1541 = vmatpush1.msra.mxu0 %v1424
        %1542 = vmatprep.subr.mxu0 0.0
        %1543 = vmatpush1.msra.mxu0 %v1425
        %1544 = vmatprep.subr.mxu0 0.0
        %1545 = vmatpush1.msra.mxu0 %v1426
        %1546 = vmatprep.subr.mxu0 0.0
        %1547 = vmatpush1.msra.mxu0 %v1427
        %1548 = vmatprep.subr.mxu0 0.0
        %1549 = vmatpush1.msra.mxu0 0.0
        %1550 = vmatprep.subr.mxu0 0.0
        %1551 = vmatpush1.msra.mxu0 0.0
        %1552 = vmatprep.subr.mxu0 0.0
        %1553 = vmatpush1.msra.mxu0 0.0
        %1554 = vmatprep.subr.mxu0 0.0
        %1555 = vmatpush1.msra.mxu0 0.0
        %1556 = vmatprep.subr.mxu0 0.0
        %1557 = vmatpush1.msra.mxu0 0.0
        %1558 = vmatprep.subr.mxu0 0.0
        %1559 = vmatpush1.msra.mxu0 0.0
        %1560 = vmatprep.subr.mxu0 0.0
        %1561 = vmatpush1.msra.mxu0 0.0
        %1562 = vmatprep.subr.mxu0 0.0
        %1563 = vmatpush1.msra.mxu0 0.0
        %1564 = vmatprep.subr.mxu0 0.0
        %1565 = vmatpush1.msra.mxu0 0.0
        %1566 = vmatprep.subr.mxu0 0.0
        %1567 = vmatpush1.msra.mxu0 0.0
        %1568 = vmatprep.subr.mxu0 0.0
        %1569 = vmatpush1.msra.mxu0 0.0
        %1570 = vmatprep.subr.mxu0 0.0
        %1571 = vmatpush1.msra.mxu0 0.0
        %1572 = vmatprep.subr.mxu0 0.0
        %1573 = vmatpush1.msra.mxu0 0.0
        %1574 = vmatprep.subr.mxu0 0.0
        %1575 = vmatpush1.msra.mxu0 0.0
        %1576 = vmatprep.subr.mxu0 0.0
        %1577 = vmatpush1.msra.mxu0 0.0
        %1578 = vmatprep.subr.mxu0 0.0
        %1579 = vmatpush1.msra.mxu0 0.0
        %1580 = vmatprep.subr.mxu0 0.0
        %1581 = vmatpush1.msra.mxu0 0.0
        %1582 = vmatprep.subr.mxu0 0.0
        %1583 = vmatpush1.msra.mxu0 0.0
        %1584 = vmatprep.subr.mxu0 0.0
        %1585 = vmatpush1.msra.mxu0 0.0
        %1586 = vmatprep.subr.mxu0 0.0
        %1587 = vmatpush1.msra.mxu0 0.0
        %1588 = vmatprep.subr.mxu0 0.0
        %1589 = vmatpush1.msra.mxu0 0.0
        %1590 = vmatprep.subr.mxu0 0.0
        %1591 = vmatpush1.msra.mxu0 0.0
        %1592 = vmatprep.subr.mxu0 0.0
        %1593 = vmatpush1.msra.mxu0 0.0
        %1594 = vmatprep.subr.mxu0 0.0
        %1595 = vmatpush1.msra.mxu0 0.0
        %1596 = vmatprep.mubr.f32.mxu0 0.0
        %1597 = vmatmul.mubr.f32.gmra.mrb[0].mxu0 %v1437
        %v1598 = vpop.f32.mrb[0].mxu0
        %v1599 = vadd.f32 %v1433, %v1598
        %v1600 = vpop.f32.mrb[0].mxu0
        %1601 = vmatprep.mubr.f32.mxu0 0.0
        %1602 = vmatmul.mubr.f32.gmra.mrb[0].mxu0 %v1440
        %v1603 = vpop.f32.mrb[0].mxu0
        %v1604 = vadd.f32 %v1433, %v1603
        %v1605 = vpop.f32.mrb[0].mxu0
        %1606 = vmatprep.mubr.f32.mxu0 0.0
        %1607 = vmatmul.mubr.f32.gmra.mrb[0].mxu0 %v1443
        %v1608 = vpop.f32.mrb[0].mxu0
        %v1609 = vadd.f32 %v1433, %v1608
        %v1610 = vpop.f32.mrb[0].mxu0
        %1611 = vmatprep.mubr.f32.mxu0 0.0
        %1612 = vmatmul.mubr.f32.gmra.mrb[0].mxu0 %v1446
        %v1613 = vpop.f32.mrb[0].mxu0
        %v1614 = vadd.f32 %v1433, %v1613
        %v1615 = vpop.f32.mrb[0].mxu0
        %1616 = vmatprep.mubr.f32.mxu0 0.0
        %1617 = vmatmul.mubr.f32.gmra.mrb[0].mxu0 %v1449
        %v1618 = vpop.f32.mrb[0].mxu0
        %v1619 = vadd.f32 %v1433, %v1618
        %v1620 = vpop.f32.mrb[0].mxu0
        %1621 = vmatprep.mubr.f32.mxu0 0.0
        %1622 = vmatmul.mubr.f32.gmra.mrb[0].mxu0 %v1452
        %v1623 = vpop.f32.mrb[0].mxu0
        %v1624 = vadd.f32 %v1433, %v1623
        %v1625 = vpop.f32.mrb[0].mxu0
        %1626 = vmatprep.mubr.f32.mxu0 0.0
        %1627 = vmatmul.mubr.f32.gmra.mrb[0].mxu0 %v1455
        %v1628 = vpop.f32.mrb[0].mxu0
        %v1629 = vadd.f32 %v1433, %v1628
        %v1630 = vpop.f32.mrb[0].mxu0
        %1631 = vmatprep.mubr.f32.mxu0 0.0
        %1632 = vmatmul.mubr.f32.gmra.mrb[0].mxu0 %v1458
        %v1633 = vpop.f32.mrb[0].mxu0
        %v1634 = vadd.f32 %v1433, %v1633
        %v1635 = vpop.f32.mrb[0].mxu0
        %1636 = vmatprep.mubr.f32.mxu0 0.0
        %1637 = vmatmul.mubr.f32.gmra.mrb[0].mxu0 %v1461
        %v1638 = vpop.f32.mrb[0].mxu0
        %v1639 = vadd.f32 %v1433, %v1638
        %v1640 = vpop.f32.mrb[0].mxu0
        %1641 = vmatprep.mubr.f32.mxu0 0.0
        %1642 = vmatmul.mubr.f32.gmra.mrb[0].mxu0 %v1464
        %v1643 = vpop.f32.mrb[0].mxu0
        %v1644 = vadd.f32 %v1433, %v1643
        %v1645 = vpop.f32.mrb[0].mxu0
        %1646 = vmatprep.mubr.f32.mxu0 0.0
        %1647 = vmatmul.mubr.f32.gmra.mrb[0].mxu0 %v1467
        %v1648 = vpop.f32.mrb[0].mxu0
        %v1649 = vadd.f32 %v1433, %v1648
        %v1650 = vpop.f32.mrb[0].mxu0
        %1651 = vmatprep.mubr.f32.mxu0 0.0
        %1652 = vmatmul.mubr.f32.gmra.mrb[0].mxu0 %v1470
        %v1653 = vpop.f32.mrb[0].mxu0
        %v1654 = vadd.f32 %v1433, %v1653
        %v1655 = vpop.f32.mrb[0].mxu0
        %1656 = vmatprep.mubr.f32.mxu0 0.0
        %1657 = vmatmul.mubr.f32.gmra.mrb[0].mxu0 %v1473
        %v1658 = vpop.f32.mrb[0].mxu0
        %v1659 = vadd.f32 %v1433, %v1658
        %v1660 = vpop.f32.mrb[0].mxu0
        %1661 = vmatprep.mubr.f32.mxu0 0.0
        %1662 = vmatmul.mubr.f32.gmra.mrb[0].mxu0 %v1476
        %v1663 = vpop.f32.mrb[0].mxu0
        %v1664 = vadd.f32 %v1433, %v1663
        %v1665 = vpop.f32.mrb[0].mxu0
        %1666 = vmatprep.mubr.f32.mxu0 0.0
        %1667 = vmatmul.mubr.f32.gmra.mrb[0].mxu0 %v1479
        %v1668 = vpop.f32.mrb[0].mxu0
        %v1669 = vadd.f32 %v1433, %v1668
        %v1670 = vpop.f32.mrb[0].mxu0
        %1671 = vmatprep.mubr.f32.mxu0 0.0
        %1672 = vmatmul.mubr.f32.gmra.mrb[0].mxu0 %v1482
        %v1673 = vpop.f32.mrb[0].mxu0
        %v1674 = vadd.f32 %v1433, %v1673
        %v1675 = vpop.f32.mrb[0].mxu0
        %1676 = vmatprep.mubr.f32.mxu0 0.0
        %1677 = vmatmul.mubr.f32.gmra.mrb[0].mxu0 %v1485
        %v1678 = vpop.f32.mrb[0].mxu0
        %v1679 = vadd.f32 %v1433, %v1678
        %v1680 = vpop.f32.mrb[0].mxu0
        %1681 = vmatprep.mubr.f32.mxu0 0.0
        %1682 = vmatmul.mubr.f32.gmra.mrb[0].mxu0 %v1488
        %v1683 = vpop.f32.mrb[0].mxu0
        %v1684 = vadd.f32 %v1433, %v1683
        %v1685 = vpop.f32.mrb[0].mxu0
        %1686 = vmatprep.mubr.f32.mxu0 0.0
        %1687 = vmatmul.mubr.f32.gmra.mrb[0].mxu0 %v1491
        %v1688 = vpop.f32.mrb[0].mxu0
        %v1689 = vadd.f32 %v1433, %v1688
        %v1690 = vpop.f32.mrb[0].mxu0
        %1691 = vmatprep.mubr.f32.mxu0 0.0
        %1692 = vmatmul.mubr.f32.gmra.mrb[0].mxu0 %v1494
        %v1693 = vpop.f32.mrb[0].mxu0
        %v1694 = vadd.f32 %v1433, %v1693
        %v1695 = vpop.f32.mrb[0].mxu0
        %1696 = vmatprep.mubr.f32.mxu0 0.0
        %1697 = vmatmul.mubr.f32.gmra.mrb[0].mxu0 %v1497
        %v1698 = vpop.f32.mrb[0].mxu0
        %v1699 = vadd.f32 %v1433, %v1698
        %v1700 = vpop.f32.mrb[0].mxu0
        %1701 = vmatprep.mubr.f32.mxu0 0.0
        %1702 = vmatmul.mubr.f32.gmra.mrb[0].mxu0 %v1500
        %v1703 = vpop.f32.mrb[0].mxu0
        %v1704 = vadd.f32 %v1433, %v1703
        %v1705 = vpop.f32.mrb[0].mxu0
        %1706 = vmatprep.mubr.f32.mxu0 0.0
        %1707 = vmatmul.mubr.f32.gmra.mrb[0].mxu0 %v1503
        %v1708 = vpop.f32.mrb[0].mxu0
        %v1709 = vadd.f32 %v1433, %v1708
        %v1710 = vpop.f32.mrb[0].mxu0
        %1711 = vmatprep.mubr.f32.mxu0 0.0
        %1712 = vmatmul.mubr.f32.gmra.mrb[0].mxu0 %v1506
        %v1713 = vpop.f32.mrb[0].mxu0
        %v1714 = vadd.f32 %v1433, %v1713
        %v1715 = vpop.f32.mrb[0].mxu0
        %1716 = vmatprep.mubr.f32.mxu0 0.0
        %1717 = vmatmul.mubr.f32.gmra.mrb[0].mxu0 %v1509
        %v1718 = vpop.f32.mrb[0].mxu0
        %v1719 = vadd.f32 %v1433, %v1718
        %v1720 = vpop.f32.mrb[0].mxu0
        %1721 = vmatprep.mubr.f32.mxu0 0.0
        %1722 = vmatmul.mubr.f32.gmra.mrb[0].mxu0 %v1512
        %v1723 = vpop.f32.mrb[0].mxu0
        %v1724 = vadd.f32 %v1433, %v1723
        %v1725 = vpop.f32.mrb[0].mxu0
        %1726 = vmatprep.mubr.f32.mxu0 0.0
        %1727 = vmatmul.mubr.f32.gmra.mrb[0].mxu0 %v1515
        %v1728 = vpop.f32.mrb[0].mxu0
        %v1729 = vadd.f32 %v1433, %v1728
        %v1730 = vpop.f32.mrb[0].mxu0
        %1731 = vmatprep.mubr.f32.mxu0 0.0
        %1732 = vmatmul.mubr.f32.gmra.mrb[0].mxu0 %v1518
        %v1733 = vpop.f32.mrb[0].mxu0
        %v1734 = vadd.f32 %v1433, %v1733
        %v1735 = vpop.f32.mrb[0].mxu0
        %1736 = vmatprep.mubr.f32.mxu0 0.0
        %1737 = vmatmul.mubr.f32.gmra.mrb[0].mxu0 %v1521
        %v1738 = vpop.f32.mrb[0].mxu0
        %v1739 = vadd.f32 %v1433, %v1738
        %v1740 = vpop.f32.mrb[0].mxu0
        %1741 = vmatprep.mubr.f32.mxu0 0.0
        %1742 = vmatmul.mubr.f32.gmra.mrb[0].mxu0 %v1524
        %v1743 = vpop.f32.mrb[0].mxu0
        %v1744 = vadd.f32 %v1433, %v1743
        %v1745 = vpop.f32.mrb[0].mxu0
        %1746 = vmatprep.mubr.f32.mxu0 0.0
        %1747 = vmatmul.mubr.f32.gmra.mrb[0].mxu0 %v1527
        %v1748 = vpop.f32.mrb[0].mxu0
        %v1749 = vadd.f32 %v1433, %v1748
        %v1750 = vpop.f32.mrb[0].mxu0
        %1751 = vmatprep.mubr.f32.mxu0 0.0
        %1752 = vmatmul.mubr.f32.gmra.mrb[0].mxu0 %v1530
        %v1753 = vpop.f32.mrb[0].mxu0
        %v1754 = vadd.f32 %v1433, %v1753
        %v1755 = vpop.f32.mrb[0].mxu0
        %1756 = vdwg.mxu0
        %v1757 = vtanh.pop %v1599
        %v1758 = vtanh.pop %v1604
        %v1759 = vtanh.pop %v1609
        %v1760 = vtanh.pop %v1614
        %v1761 = vtanh.pop %v1619
        %v1762 = vtanh.pop %v1624
        %v1763 = vtanh.pop %v1629
        %v1764 = vtanh.pop %v1634
        %v1765 = vtanh.pop %v1639
        %v1766 = vtanh.pop %v1644
        %v1767 = vtanh.pop %v1649
        %v1768 = vtanh.pop %v1654
        %v1769 = vtanh.pop %v1659
        %v1770 = vtanh.pop %v1664
        %v1771 = vtanh.pop %v1669
        %v1772 = vtanh.pop %v1674
        %v1773 = vtanh.pop %v1679
        %v1774 = vtanh.pop %v1684
        %v1775 = vtanh.pop %v1689
        %v1776 = vtanh.pop %v1694
        %v1777 = vtanh.pop %v1699
        %v1778 = vtanh.pop %v1704
        %v1779 = vtanh.pop %v1709
        %v1780 = vtanh.pop %v1714
        %v1781 = vtanh.pop %v1719
        %v1782 = vtanh.pop %v1724
        %v1783 = vtanh.pop %v1729
        %v1784 = vtanh.pop %v1734
        %v1785 = vtanh.pop %v1739
        %v1786 = vtanh.pop %v1744
        %v1787 = vtanh.pop %v1749
        %v1788 = vtanh.pop %v1754
        %1789 = vst [vmem:[%s380] sm:$0xff] %v1757
        %1790 = vst [vmem:[%s380 + $0x8] sm:$0xff] %v1758
        %1791 = vst [vmem:[%s380 + $0x10] sm:$0xff] %v1759
        %1792 = vst [vmem:[%s380 + $0x18] sm:$0xff] %v1760
        %1793 = vst [vmem:[%s380 + $0x20] sm:$0xff] %v1761
        %1794 = vst [vmem:[%s380 + $0x28] sm:$0xff] %v1762
        %1795 = vst [vmem:[%s380 + $0x30] sm:$0xff] %v1763
        %1796 = vst [vmem:[%s380 + $0x38] sm:$0xff] %v1764
        %1797 = vst [vmem:[%s380 + $0x40] sm:$0xff] %v1765
        %1798 = vst [vmem:[%s380 + $0x48] sm:$0xff] %v1766
        %1799 = vst [vmem:[%s380 + $0x50] sm:$0xff] %v1767
        %1800 = vst [vmem:[%s380 + $0x58] sm:$0xff] %v1768
        %1801 = vst [vmem:[%s380 + $0x60] sm:$0xff] %v1769
        %1802 = vst [vmem:[%s380 + $0x68] sm:$0xff] %v1770
        %1803 = vst [vmem:[%s380 + $0x70] sm:$0xff] %v1771
        %1804 = vst [vmem:[%s380 + $0x78] sm:$0xff] %v1772
        %1805 = vst [vmem:[%s380 + $0x80] sm:$0xff] %v1773
        %1806 = vst [vmem:[%s380 + $0x88] sm:$0xff] %v1774
        %1807 = vst [vmem:[%s380 + $0x90] sm:$0xff] %v1775
        %1808 = vst [vmem:[%s380 + $0x98] sm:$0xff] %v1776
        %1809 = vst [vmem:[%s380 + $0xa0] sm:$0xff] %v1777
        %1810 = vst [vmem:[%s380 + $0xa8] sm:$0xff] %v1778
        %1811 = vst [vmem:[%s380 + $0xb0] sm:$0xff] %v1779
        %1812 = vst [vmem:[%s380 + $0xb8] sm:$0xff] %v1780
        %1813 = vst [vmem:[%s380 + $0xc0] sm:$0xff] %v1781
        %1814 = vst [vmem:[%s380 + $0xc8] sm:$0xff] %v1782
        %1815 = vst [vmem:[%s380 + $0xd0] sm:$0xff] %v1783
        %1816 = vst [vmem:[%s380 + $0xd8] sm:$0xff] %v1784
        %1817 = vst [vmem:[%s380 + $0xe0] sm:$0xff] %v1785
        %1818 = vst [vmem:[%s380 + $0xe8] sm:$0xff] %v1786
        %1819 = vst [vmem:[%s380 + $0xf0] sm:$0xff] %v1787
        %1820 = vst [vmem:[%s380 + $0xf8] sm:$0xff] %v1788
        %s1821 = sand.u32 %s229, 1
        %s1822 = scalar_lea.sflag [#allocation4], %s1821
        %s1823 = sand.u32 %s229, 1
        %s1824 = smul.addr %s1823, 256
        %s1825 = scalar_lea.vmem [#allocation8], %s1824
        // Predicated region
        $region69: #{tpu_custom_call.1} parent=55 // pred_check
          %p1826 = pneg %p239
        $region70: #{tpu_custom_call.1} parent=55 // pred_check_branch
          %1828 = sbr.rel (%p1826) target = $region72
        $region71: #{tpu_custom_call.1} parent=55 // pred_region
          %s1829 = smul.u32 32, %s27
          %s1831 = ssub.s32 4096, 4096
          %1832 = vsyncadd %s1822, %s1831
          %s1833 = smul.addr %s1829, 128
          %s1834 = scalar_lea.hbm %s9, %s1833
          %s1835 = sshll.u32 %s1825, 4
          %s1836 = int_to_ptr.vmem [resolvable:$true] %s1835
          %1841 = dma.vmem_to_hbm [thread:$0]  %s1836, 4096, %s1834, %s1822, 128, 128, 8
        $region72: #{tpu_custom_call.1} parent=55 // pred_fallthru
          _
      $region56: #{tpu_custom_call.1} parent=5 // pred_fallthru
        _
      %p1842 = scmp.le.s32.totalorder 2, %s22
      // Predicated region
      $region73: #{tpu_custom_call.1} parent=5 // pred_check
        %p1843 = pneg %p1842
      $region74: #{tpu_custom_call.1} parent=5 // pred_check_branch
        %1845 = sbr.rel (%p1843) target = $region76
      $region75: #{tpu_custom_call.1} parent=5 // pred_region
        %s1846 = ssub.s32 %s22, 2
        // Predicated region
        $region77: #{tpu_custom_call.1} parent=75 // pred_check
          %p1847 = pneg %p245
        $region78: #{tpu_custom_call.1} parent=75 // pred_check_branch
          %1849 = sbr.rel (%p1847) target = $region80
        $region79: #{tpu_custom_call.1} parent=75 // pred_region
          %s1850 = sand.u32 %s230, 1
          %s1851 = scalar_lea.sflag [#allocation4], %s1850
          %s1852 = sand.u32 %s230, 1
          %s1853 = smul.addr %s1852, 256
          %s1854 = scalar_lea.vmem [#allocation8], %s1853
          %1855 = dma.done %s1851, 4096
        $region80: #{tpu_custom_call.1} parent=75 // pred_fallthru
          _
      $region76: #{tpu_custom_call.1} parent=5 // pred_fallthru
        _
    $region6: #{tpu_custom_call.1} parent=1 // loop_footer
      %s26 = sadd.s32 1, %s22
    $region7: #{tpu_custom_call.1} parent=1 // loop_footer_branch
      %21 = sbr.rel target = $region3
    $region8: #{tpu_custom_call.1} parent=1 // loop_exit
      _
    %1856 = vsyncpa [#allocation3], 1
    %s1857 = scalar_lea.sflag [#allocation3], 1
    %1858 = vsyncpa %s1857, 1
    %1859 = vsyncpa [#allocation6], 1
    %1860 = vsyncpa [#allocation4], 1
    %s1861 = scalar_lea.sflag [#allocation4], 1
    %1862 = vsyncpa %s1861, 1

</llo_original>
